<compile_context>
chip_gen: v7x
topology: tpu7x:2x2x1
jax: 0.10.0
libtpu: 0.0.40
codegen_flags: <defaults>
</compile_context>

<pallas_src>
import functools

import jax
import jax.numpy as jnp
from jax.experimental import pallas as pl
from jax.experimental.pallas import tpu as pltpu


def _elu(x):
    # ELU(alpha=1): x for x>0 else exp(x)-1 (clamped exp arg avoids overflow).
    return jnp.where(x > 0, x, jnp.exp(jnp.minimum(x, 0.0)) - 1.0)


def _speech_encoder_kernel(
    speech_ref, cond_ref, bn_scale_ref, bn_shift_ref,
    w1s_ref, w1c_ref, b1_ref,
    w2_ref, b2_ref, w3_ref, b3_ref, w4_ref, b4_ref,
    fc1wa_ref, fc1wc_ref, fc1b_ref, fc2w_ref, fc2b_ref,
    out_ref, *, batch):
    """Whole forward pass in one invocation; everything resident in VMEM.

    speech_ref : (T*B, 26)  width-major (row = w*B + b)
    cond_ref   : (B, 8)
    conv tap weights wNs/wN : (3, Cin, Cout); biases (1, Cout)
    fc weights pre-transposed; fc1 split into conv-feature / condition parts.
    """
    width = speech_ref.shape[0] // batch                      # 16

    # --- BatchNorm1d (eval): per-channel affine over the 26 mel channels.
    x = speech_ref[...] * bn_scale_ref[...] + bn_shift_ref[...]      # (16*B, 26)
    cond = cond_ref[...]                                             # (B, 8)

    def conv_taps(x2d, w_ref, cur_width):
        # kernel (1,3), stride (1,2), circular padding along width,
        # expressed as 3 matmuls over statically gathered B-row slabs.
        wo = cur_width // 2
        acc = None
        for tap in (-1, 0, 1):
            parts = []
            for j in range(wo):
                src = (2 * j + tap) % cur_width
                parts.append(x2d[src * batch:(src + 1) * batch, :])
            xk = parts[0] if wo == 1 else jnp.concatenate(parts, axis=0)  # (wo*B, Cin)
            yk = jnp.dot(xk, w_ref[tap + 1], preferred_element_type=jnp.float32)
            acc = yk if acc is None else acc + yk
        return acc, wo

    # --- conv1 (34 -> 32): the 8 condition channels are constant along width,
    #     so their contribution collapses to one (B,8)@(8,32) matmul (conv taps
    #     pre-summed into w1c), shared by every output position.
    acc, wo = conv_taps(x, w1s_ref, width)
    cond_part = (jnp.dot(cond, w1c_ref[...], preferred_element_type=jnp.float32)
                 + b1_ref[...])                                       # (B, 32)
    cond_rep = jnp.concatenate([cond_part] * wo, axis=0) if wo > 1 else cond_part
    y = _elu(acc + cond_rep)                                          # (8*B, 32)
    width = wo

    # --- conv2 (32 -> 32)
    acc, wo = conv_taps(y, w2_ref, width)
    y = _elu(acc + b2_ref[...])                                       # (4*B, 32)
    width = wo
    # --- conv3 (32 -> 64)
    acc, wo = conv_taps(y, w3_ref, width)
    y = _elu(acc + b3_ref[...])                                       # (2*B, 64)
    width = wo
    # --- conv4 (64 -> 64)
    acc, wo = conv_taps(y, w4_ref, width)
    y = _elu(acc + b4_ref[...])                                       # (B, 64)

    # --- fc1 (72 -> 128): the [conv_feat | condition] concat is folded into
    #     two matmuls; then fc2 (128 -> expression_dim).
    h = _elu(jnp.dot(y, fc1wa_ref[...], preferred_element_type=jnp.float32)
             + jnp.dot(cond, fc1wc_ref[...], preferred_element_type=jnp.float32)
             + fc1b_ref[...])                                         # (B, 128)
    out = (jnp.dot(h, fc2w_ref[...], preferred_element_type=jnp.float32)
           + fc2b_ref[...])                                           # (B, E)
    out_ref[...] = out.astype(out_ref.dtype)


def speech_encoder_forward(speech_feature, condition, params):
    """speech_feature: (B, 16, 26) f32, condition: (B, 8) f32 -> (B, expression_dim)."""
    B, T, n_mel = speech_feature.shape
    n_cond = condition.shape[1]
    assert T == 16 and n_mel == 26 and n_mel + n_cond == 34

    # BatchNorm (eval) folded into per-channel scale/shift.
    eps = 1e-5
    gamma, beta = params["bn_gamma"], params["bn_beta"]
    mean, var = params["bn_mean"], params["bn_var"]
    inv_std = 1.0 / jnp.sqrt(var + eps)
    bn_scale = (gamma * inv_std).reshape(1, n_mel)
    bn_shift = (beta - mean * gamma * inv_std).reshape(1, n_mel)

    # Conv weights: torch (Cout, Cin, 1, 3) -> per-tap (3, Cin, Cout).
    def taps(w):
        return jnp.transpose(w[:, :, 0, :], (2, 1, 0))

    w1 = params["conv1_w"]
    w1s = taps(w1[:, :n_mel])                                    # (3, 26, 32)
    w1c = jnp.transpose(jnp.sum(w1[:, n_mel:, 0, :], axis=-1))   # (8, 32), taps summed
    w2 = taps(params["conv2_w"])                                 # (3, 32, 32)
    w3 = taps(params["conv3_w"])                                 # (3, 32, 64)
    w4 = taps(params["conv4_w"])                                 # (3, 64, 64)
    b1 = params["conv1_b"].reshape(1, -1)
    b2 = params["conv2_b"].reshape(1, -1)
    b3 = params["conv3_b"].reshape(1, -1)
    b4 = params["conv4_b"].reshape(1, -1)

    fc1_w = params["fc1_w"]                    # (128, 72) torch (out, in)
    fc1wa = jnp.transpose(fc1_w[:, :64])       # (64, 128)  conv-feature part
    fc1wc = jnp.transpose(fc1_w[:, 64:])       # (8, 128)   condition part
    fc1b = params["fc1_b"].reshape(1, -1)
    fc2w = jnp.transpose(params["fc2_w"])      # (128, E)
    fc2b = params["fc2_b"].reshape(1, -1)
    expression_dim = fc2w.shape[1]

    # Width-major layout (T*B, C): each conv tap gathers a contiguous B-row
    # slab, independent of batch size.
    speech_wb = jnp.transpose(speech_feature, (1, 0, 2)).reshape(T * B, n_mel)

    operands = (speech_wb, condition, bn_scale, bn_shift,
                w1s, w1c, b1, w2, b2, w3, b3, w4, b4,
                fc1wa, fc1wc, fc1b, fc2w, fc2b)

    flops = 2 * B * ((T // 2) * (n_mel * 3 + n_cond) * 32
                     + (T // 4) * 32 * 3 * 32
                     + (T // 8) * 32 * 3 * 64
                     + (T // 16) * 64 * 3 * 64
                     + 72 * 128
                     + 128 * expression_dim)
    transcendentals = B * ((T // 2) * 32 + (T // 4) * 32
                           + (T // 8) * 64 + (T // 16) * 64 + 128)
    bytes_accessed = sum(int(a.size) * 4 for a in operands) + B * expression_dim * 4

    out = pl.pallas_call(
        functools.partial(_speech_encoder_kernel, batch=B),
        out_shape=jax.ShapeDtypeStruct((B, expression_dim), jnp.float32),
        in_specs=[pl.BlockSpec(memory_space=pltpu.MemorySpace.VMEM)
                  for _ in operands],
        out_specs=pl.BlockSpec(memory_space=pltpu.MemorySpace.VMEM),
        cost_estimate=pl.CostEstimate(flops=flops,
                                      transcendentals=transcendentals,
                                      bytes_accessed=bytes_accessed),
    )(*operands)
    return out


def _reference_forward(speech_feature, condition, params):
    """Plain-JAX mirror of the PyTorch forward (eval-mode BN), for checking."""
    hi = jax.lax.Precision.HIGHEST
    eps = 1e-5
    x = jnp.transpose(speech_feature, (0, 2, 1))                     # (B, 26, T)
    x = (x - params["bn_mean"][None, :, None]) / jnp.sqrt(
        params["bn_var"][None, :, None] + eps)
    x = x * params["bn_gamma"][None, :, None] + params["bn_beta"][None, :, None]
    x = x[:, :, None, :]                                             # (B, 26, 1, T)
    B, n_cond = condition.shape
    c = jnp.broadcast_to(condition[:, :, None, None], (B, n_cond, 1, x.shape[-1]))
    feat = jnp.concatenate([x, c], axis=1)                           # (B, 34, 1, T)

    def circ_conv(z, w, b):
        zp = jnp.concatenate([z[..., -1:], z, z[..., :1]], axis=-1)  # circular pad W by 1
        y = jax.lax.conv_general_dilated(
            zp, w, window_strides=(1, 2), padding="VALID",
            dimension_numbers=("NCHW", "OIHW", "NCHW"), precision=hi)
        return y + b[None, :, None, None]

    feat = jax.nn.elu(circ_conv(feat, params["conv1_w"], params["conv1_b"]))
    feat = jax.nn.elu(circ_conv(feat, params["conv2_w"], params["conv2_b"]))
    feat = jax.nn.elu(circ_conv(feat, params["conv3_w"], params["conv3_b"]))
    feat = jax.nn.elu(circ_conv(feat, params["conv4_w"], params["conv4_b"]))
    feat = feat.reshape(B, -1)                                       # squeeze().squeeze()
    feat = jnp.concatenate([feat, condition], axis=1)                # (B, 72)
    feat = jax.nn.elu(jnp.matmul(feat, params["fc1_w"].T, precision=hi)
                      + params["fc1_b"])
    feat = jnp.matmul(feat, params["fc2_w"].T, precision=hi) + params["fc2_b"]
    return feat


if __name__ == "__main__":
    B = 2            # wrapper/kernel work for any B; larger B (multiple of 8)
                     # amortizes launch overhead and fills MXU rows.
    T = 16           # time steps (fixed by the condition repeat(1,1,1,16))
    n_mel = 26       # BatchNorm1d(num_features=26)
    n_cond = 8       # conv1 in_channels 34 - 26
    expression_dim = 32

    key = jax.random.PRNGKey(0)
    ks = jax.random.split(key, 18)

    speech = jax.random.normal(ks[0], (B, T, n_mel), dtype=jnp.float32)
    condition = jax.random.normal(ks[1], (B, n_cond), dtype=jnp.float32)

    def kaiming_fan_out(k, shape, fan_out):
        return jnp.sqrt(2.0 / fan_out) * jax.random.normal(k, shape, dtype=jnp.float32)

    params = {
        # Synthetic "trained" batch-norm statistics (eval mode).
        "bn_gamma": jax.random.uniform(ks[2], (n_mel,), minval=0.5, maxval=1.5,
                                       dtype=jnp.float32),
        "bn_beta": 0.1 * jax.random.normal(ks[3], (n_mel,), dtype=jnp.float32),
        "bn_mean": 0.1 * jax.random.normal(ks[4], (n_mel,), dtype=jnp.float32),
        "bn_var": jax.random.uniform(ks[5], (n_mel,), minval=0.5, maxval=1.5,
                                     dtype=jnp.float32),
        # Weights in torch layout; biases randomized (module zero-inits them)
        # so the bias-add paths are actually exercised by the check.
        "conv1_w": kaiming_fan_out(ks[6], (32, 34, 1, 3), 32 * 3),
        "conv1_b": 0.05 * jax.random.normal(ks[7], (32,), dtype=jnp.float32),
        "conv2_w": kaiming_fan_out(ks[8], (32, 32, 1, 3), 32 * 3),
        "conv2_b": 0.05 * jax.random.normal(ks[9], (32,), dtype=jnp.float32),
        "conv3_w": kaiming_fan_out(ks[10], (64, 32, 1, 3), 64 * 3),
        "conv3_b": 0.05 * jax.random.normal(ks[11], (64,), dtype=jnp.float32),
        "conv4_w": kaiming_fan_out(ks[12], (64, 64, 1, 3), 64 * 3),
        "conv4_b": 0.05 * jax.random.normal(ks[13], (64,), dtype=jnp.float32),
        "fc1_w": kaiming_fan_out(ks[14], (128, 72), 128),
        "fc1_b": 0.05 * jax.random.normal(ks[15], (128,), dtype=jnp.float32),
        "fc2_w": kaiming_fan_out(ks[16], (expression_dim, 128), expression_dim),
        "fc2_b": 0.05 * jax.random.normal(ks[17], (expression_dim,), dtype=jnp.float32),
    }

    out = speech_encoder_forward(speech, condition, params)
    out = jax.block_until_ready(out)

    ref = _reference_forward(speech, condition, params)
    assert out.shape == (B, expression_dim)
    max_err = float(jnp.max(jnp.abs(out - ref)))
    assert jnp.allclose(out, ref, atol=2e-2, rtol=2e-2), f"max abs err {max_err}"
    print("KERNEL_OK")
</pallas_src>

<mosaic_0001>
module attributes {stable_mosaic.version = 11 : i64} {
  func.func @_speech_encoder_kernel(%arg0: memref<32x26xf32, #tpu.memory_space<vmem>>, %arg1: memref<2x8xf32, #tpu.memory_space<vmem>>, %arg2: memref<1x26xf32, #tpu.memory_space<vmem>>, %arg3: memref<1x26xf32, #tpu.memory_space<vmem>>, %arg4: memref<3x26x32xf32, #tpu.memory_space<vmem>>, %arg5: memref<8x32xf32, #tpu.memory_space<vmem>>, %arg6: memref<1x32xf32, #tpu.memory_space<vmem>>, %arg7: memref<3x32x32xf32, #tpu.memory_space<vmem>>, %arg8: memref<1x32xf32, #tpu.memory_space<vmem>>, %arg9: memref<3x32x64xf32, #tpu.memory_space<vmem>>, %arg10: memref<1x64xf32, #tpu.memory_space<vmem>>, %arg11: memref<3x64x64xf32, #tpu.memory_space<vmem>>, %arg12: memref<1x64xf32, #tpu.memory_space<vmem>>, %arg13: memref<64x128xf32, #tpu.memory_space<vmem>>, %arg14: memref<8x128xf32, #tpu.memory_space<vmem>>, %arg15: memref<1x128xf32, #tpu.memory_space<vmem>>, %arg16: memref<128x32xf32, #tpu.memory_space<vmem>>, %arg17: memref<1x32xf32, #tpu.memory_space<vmem>>, %arg18: memref<2x32xf32, #tpu.memory_space<vmem>>) attributes {dimension_semantics = [], scalar_prefetch = 0 : i64, scratch_operands = 0 : i64, tpu.core_type = #tpu.core_type<tc>} {
    %c0 = arith.constant 0 : index
    %c0_0 = arith.constant 0 : index
    %0 = vector.load %arg0[%c0, %c0_0] : memref<32x26xf32, #tpu.memory_space<vmem>>, vector<32x26xf32>
    %c0_1 = arith.constant 0 : index
    %c0_2 = arith.constant 0 : index
    %1 = vector.load %arg2[%c0_1, %c0_2] : memref<1x26xf32, #tpu.memory_space<vmem>>, vector<1x26xf32>
    %2 = vector.broadcast %1 : vector<1x26xf32> to vector<32x26xf32>
    %3 = arith.mulf %0, %2 : vector<32x26xf32>
    %c0_3 = arith.constant 0 : index
    %c0_4 = arith.constant 0 : index
    %4 = vector.load %arg3[%c0_3, %c0_4] : memref<1x26xf32, #tpu.memory_space<vmem>>, vector<1x26xf32>
    %5 = vector.broadcast %4 : vector<1x26xf32> to vector<32x26xf32>
    %6 = arith.addf %3, %5 : vector<32x26xf32>
    %c0_5 = arith.constant 0 : index
    %c0_6 = arith.constant 0 : index
    %7 = vector.load %arg1[%c0_5, %c0_6] : memref<2x8xf32, #tpu.memory_space<vmem>>, vector<2x8xf32>
    %8 = vector.extract_strided_slice %6 {offsets = [30, 0], sizes = [2, 26], strides = [1, 1]} : vector<32x26xf32> to vector<2x26xf32>
    %9 = vector.extract_strided_slice %6 {offsets = [2, 0], sizes = [2, 26], strides = [1, 1]} : vector<32x26xf32> to vector<2x26xf32>
    %10 = vector.extract_strided_slice %6 {offsets = [6, 0], sizes = [2, 26], strides = [1, 1]} : vector<32x26xf32> to vector<2x26xf32>
    %11 = vector.extract_strided_slice %6 {offsets = [10, 0], sizes = [2, 26], strides = [1, 1]} : vector<32x26xf32> to vector<2x26xf32>
    %12 = vector.extract_strided_slice %6 {offsets = [14, 0], sizes = [2, 26], strides = [1, 1]} : vector<32x26xf32> to vector<2x26xf32>
    %13 = vector.extract_strided_slice %6 {offsets = [18, 0], sizes = [2, 26], strides = [1, 1]} : vector<32x26xf32> to vector<2x26xf32>
    %14 = vector.extract_strided_slice %6 {offsets = [22, 0], sizes = [2, 26], strides = [1, 1]} : vector<32x26xf32> to vector<2x26xf32>
    %15 = vector.extract_strided_slice %6 {offsets = [26, 0], sizes = [2, 26], strides = [1, 1]} : vector<32x26xf32> to vector<2x26xf32>
    %16 = tpu.concatenate %8, %9, %10, %11, %12, %13, %14, %15 in 0 : vector<2x26xf32>, vector<2x26xf32>, vector<2x26xf32>, vector<2x26xf32>, vector<2x26xf32>, vector<2x26xf32>, vector<2x26xf32>, vector<2x26xf32> -> vector<16x26xf32>
    %c0_7 = arith.constant 0 : index
    %c0_8 = arith.constant 0 : index
    %c0_9 = arith.constant 0 : index
    %17 = vector.load %arg4[%c0_7, %c0_8, %c0_9] : memref<3x26x32xf32, #tpu.memory_space<vmem>>, vector<1x26x32xf32>
    %18 = vector.shape_cast %17 : vector<1x26x32xf32> to vector<26x32xf32>
    %cst = arith.constant dense<0.000000e+00> : vector<16x32xf32>
    %19 = tpu.matmul %16, %18, %cst {dimension_numbers = #tpu.dot_dimension_numbers<[1], [0], [0], [1], [0, 0, 1, 1], [], []>} : vector<16x26xf32>, vector<26x32xf32>, vector<16x32xf32> -> vector<16x32xf32>
    %20 = vector.extract_strided_slice %6 {offsets = [0, 0], sizes = [2, 26], strides = [1, 1]} : vector<32x26xf32> to vector<2x26xf32>
    %21 = vector.extract_strided_slice %6 {offsets = [4, 0], sizes = [2, 26], strides = [1, 1]} : vector<32x26xf32> to vector<2x26xf32>
    %22 = vector.extract_strided_slice %6 {offsets = [8, 0], sizes = [2, 26], strides = [1, 1]} : vector<32x26xf32> to vector<2x26xf32>
    %23 = vector.extract_strided_slice %6 {offsets = [12, 0], sizes = [2, 26], strides = [1, 1]} : vector<32x26xf32> to vector<2x26xf32>
    %24 = vector.extract_strided_slice %6 {offsets = [16, 0], sizes = [2, 26], strides = [1, 1]} : vector<32x26xf32> to vector<2x26xf32>
    %25 = vector.extract_strided_slice %6 {offsets = [20, 0], sizes = [2, 26], strides = [1, 1]} : vector<32x26xf32> to vector<2x26xf32>
    %26 = vector.extract_strided_slice %6 {offsets = [24, 0], sizes = [2, 26], strides = [1, 1]} : vector<32x26xf32> to vector<2x26xf32>
    %27 = vector.extract_strided_slice %6 {offsets = [28, 0], sizes = [2, 26], strides = [1, 1]} : vector<32x26xf32> to vector<2x26xf32>
    %28 = tpu.concatenate %20, %21, %22, %23, %24, %25, %26, %27 in 0 : vector<2x26xf32>, vector<2x26xf32>, vector<2x26xf32>, vector<2x26xf32>, vector<2x26xf32>, vector<2x26xf32>, vector<2x26xf32>, vector<2x26xf32> -> vector<16x26xf32>
    %c1 = arith.constant 1 : index
    %c0_10 = arith.constant 0 : index
    %c0_11 = arith.constant 0 : index
    %29 = vector.load %arg4[%c1, %c0_10, %c0_11] : memref<3x26x32xf32, #tpu.memory_space<vmem>>, vector<1x26x32xf32>
    %30 = vector.shape_cast %29 : vector<1x26x32xf32> to vector<26x32xf32>
    %cst_12 = arith.constant dense<0.000000e+00> : vector<16x32xf32>
    %31 = tpu.matmul %28, %30, %cst_12 {dimension_numbers = #tpu.dot_dimension_numbers<[1], [0], [0], [1], [0, 0, 1, 1], [], []>} : vector<16x26xf32>, vector<26x32xf32>, vector<16x32xf32> -> vector<16x32xf32>
    %32 = arith.addf %19, %31 : vector<16x32xf32>
    %33 = vector.extract_strided_slice %6 {offsets = [2, 0], sizes = [2, 26], strides = [1, 1]} : vector<32x26xf32> to vector<2x26xf32>
    %34 = vector.extract_strided_slice %6 {offsets = [6, 0], sizes = [2, 26], strides = [1, 1]} : vector<32x26xf32> to vector<2x26xf32>
    %35 = vector.extract_strided_slice %6 {offsets = [10, 0], sizes = [2, 26], strides = [1, 1]} : vector<32x26xf32> to vector<2x26xf32>
    %36 = vector.extract_strided_slice %6 {offsets = [14, 0], sizes = [2, 26], strides = [1, 1]} : vector<32x26xf32> to vector<2x26xf32>
    %37 = vector.extract_strided_slice %6 {offsets = [18, 0], sizes = [2, 26], strides = [1, 1]} : vector<32x26xf32> to vector<2x26xf32>
    %38 = vector.extract_strided_slice %6 {offsets = [22, 0], sizes = [2, 26], strides = [1, 1]} : vector<32x26xf32> to vector<2x26xf32>
    %39 = vector.extract_strided_slice %6 {offsets = [26, 0], sizes = [2, 26], strides = [1, 1]} : vector<32x26xf32> to vector<2x26xf32>
    %40 = vector.extract_strided_slice %6 {offsets = [30, 0], sizes = [2, 26], strides = [1, 1]} : vector<32x26xf32> to vector<2x26xf32>
    %41 = tpu.concatenate %33, %34, %35, %36, %37, %38, %39, %40 in 0 : vector<2x26xf32>, vector<2x26xf32>, vector<2x26xf32>, vector<2x26xf32>, vector<2x26xf32>, vector<2x26xf32>, vector<2x26xf32>, vector<2x26xf32> -> vector<16x26xf32>
    %c2 = arith.constant 2 : index
    %c0_13 = arith.constant 0 : index
    %c0_14 = arith.constant 0 : index
    %42 = vector.load %arg4[%c2, %c0_13, %c0_14] : memref<3x26x32xf32, #tpu.memory_space<vmem>>, vector<1x26x32xf32>
    %43 = vector.shape_cast %42 : vector<1x26x32xf32> to vector<26x32xf32>
    %cst_15 = arith.constant dense<0.000000e+00> : vector<16x32xf32>
    %44 = tpu.matmul %41, %43, %cst_15 {dimension_numbers = #tpu.dot_dimension_numbers<[1], [0], [0], [1], [0, 0, 1, 1], [], []>} : vector<16x26xf32>, vector<26x32xf32>, vector<16x32xf32> -> vector<16x32xf32>
    %45 = arith.addf %32, %44 : vector<16x32xf32>
    %c0_16 = arith.constant 0 : index
    %c0_17 = arith.constant 0 : index
    %46 = vector.load %arg5[%c0_16, %c0_17] : memref<8x32xf32, #tpu.memory_space<vmem>>, vector<8x32xf32>
    %cst_18 = arith.constant dense<0.000000e+00> : vector<2x32xf32>
    %47 = tpu.matmul %7, %46, %cst_18 {dimension_numbers = #tpu.dot_dimension_numbers<[1], [0], [0], [1], [0, 0, 1, 1], [], []>} : vector<2x8xf32>, vector<8x32xf32>, vector<2x32xf32> -> vector<2x32xf32>
    %c0_19 = arith.constant 0 : index
    %c0_20 = arith.constant 0 : index
    %48 = vector.load %arg6[%c0_19, %c0_20] : memref<1x32xf32, #tpu.memory_space<vmem>>, vector<1x32xf32>
    %49 = vector.broadcast %48 : vector<1x32xf32> to vector<2x32xf32>
    %50 = arith.addf %47, %49 : vector<2x32xf32>
    %51 = tpu.concatenate %50, %50, %50, %50, %50, %50, %50, %50 in 0 : vector<2x32xf32>, vector<2x32xf32>, vector<2x32xf32>, vector<2x32xf32>, vector<2x32xf32>, vector<2x32xf32>, vector<2x32xf32>, vector<2x32xf32> -> vector<16x32xf32>
    %52 = arith.addf %45, %51 : vector<16x32xf32>
    %cst_21 = arith.constant 0.000000e+00 : f32
    %53 = vector.broadcast %cst_21 : f32 to vector<16x32xf32>
    %54 = arith.cmpf ogt, %52, %53 : vector<16x32xf32>
    %cst_22 = arith.constant 0.000000e+00 : f32
    %55 = vector.broadcast %cst_22 : f32 to vector<16x32xf32>
    %56 = arith.minimumf %52, %55 : vector<16x32xf32>
    %57 = math.exp %56 : vector<16x32xf32>
    %cst_23 = arith.constant 1.000000e+00 : f32
    %58 = vector.broadcast %cst_23 : f32 to vector<16x32xf32>
    %59 = arith.subf %57, %58 : vector<16x32xf32>
    %60 = arith.select %54, %52, %59 : vector<16x32xi1>, vector<16x32xf32>
    %61 = vector.extract_strided_slice %60 {offsets = [14, 0], sizes = [2, 32], strides = [1, 1]} : vector<16x32xf32> to vector<2x32xf32>
    %62 = vector.extract_strided_slice %60 {offsets = [2, 0], sizes = [2, 32], strides = [1, 1]} : vector<16x32xf32> to vector<2x32xf32>
    %63 = vector.extract_strided_slice %60 {offsets = [6, 0], sizes = [2, 32], strides = [1, 1]} : vector<16x32xf32> to vector<2x32xf32>
    %64 = vector.extract_strided_slice %60 {offsets = [10, 0], sizes = [2, 32], strides = [1, 1]} : vector<16x32xf32> to vector<2x32xf32>
    %65 = tpu.concatenate %61, %62, %63, %64 in 0 : vector<2x32xf32>, vector<2x32xf32>, vector<2x32xf32>, vector<2x32xf32> -> vector<8x32xf32>
    %c0_24 = arith.constant 0 : index
    %c0_25 = arith.constant 0 : index
    %c0_26 = arith.constant 0 : index
    %66 = vector.load %arg7[%c0_24, %c0_25, %c0_26] : memref<3x32x32xf32, #tpu.memory_space<vmem>>, vector<1x32x32xf32>
    %67 = vector.shape_cast %66 : vector<1x32x32xf32> to vector<32x32xf32>
    %cst_27 = arith.constant dense<0.000000e+00> : vector<8x32xf32>
    %68 = tpu.matmul %65, %67, %cst_27 {dimension_numbers = #tpu.dot_dimension_numbers<[1], [0], [0], [1], [0, 0, 1, 1], [], []>} : vector<8x32xf32>, vector<32x32xf32>, vector<8x32xf32> -> vector<8x32xf32>
    %69 = vector.extract_strided_slice %60 {offsets = [0, 0], sizes = [2, 32], strides = [1, 1]} : vector<16x32xf32> to vector<2x32xf32>
    %70 = vector.extract_strided_slice %60 {offsets = [4, 0], sizes = [2, 32], strides = [1, 1]} : vector<16x32xf32> to vector<2x32xf32>
    %71 = vector.extract_strided_slice %60 {offsets = [8, 0], sizes = [2, 32], strides = [1, 1]} : vector<16x32xf32> to vector<2x32xf32>
    %72 = vector.extract_strided_slice %60 {offsets = [12, 0], sizes = [2, 32], strides = [1, 1]} : vector<16x32xf32> to vector<2x32xf32>
    %73 = tpu.concatenate %69, %70, %71, %72 in 0 : vector<2x32xf32>, vector<2x32xf32>, vector<2x32xf32>, vector<2x32xf32> -> vector<8x32xf32>
    %c1_28 = arith.constant 1 : index
    %c0_29 = arith.constant 0 : index
    %c0_30 = arith.constant 0 : index
    %74 = vector.load %arg7[%c1_28, %c0_29, %c0_30] : memref<3x32x32xf32, #tpu.memory_space<vmem>>, vector<1x32x32xf32>
    %75 = vector.shape_cast %74 : vector<1x32x32xf32> to vector<32x32xf32>
    %cst_31 = arith.constant dense<0.000000e+00> : vector<8x32xf32>
    %76 = tpu.matmul %73, %75, %cst_31 {dimension_numbers = #tpu.dot_dimension_numbers<[1], [0], [0], [1], [0, 0, 1, 1], [], []>} : vector<8x32xf32>, vector<32x32xf32>, vector<8x32xf32> -> vector<8x32xf32>
    %77 = arith.addf %68, %76 : vector<8x32xf32>
    %78 = vector.extract_strided_slice %60 {offsets = [2, 0], sizes = [2, 32], strides = [1, 1]} : vector<16x32xf32> to vector<2x32xf32>
    %79 = vector.extract_strided_slice %60 {offsets = [6, 0], sizes = [2, 32], strides = [1, 1]} : vector<16x32xf32> to vector<2x32xf32>
    %80 = vector.extract_strided_slice %60 {offsets = [10, 0], sizes = [2, 32], strides = [1, 1]} : vector<16x32xf32> to vector<2x32xf32>
    %81 = vector.extract_strided_slice %60 {offsets = [14, 0], sizes = [2, 32], strides = [1, 1]} : vector<16x32xf32> to vector<2x32xf32>
    %82 = tpu.concatenate %78, %79, %80, %81 in 0 : vector<2x32xf32>, vector<2x32xf32>, vector<2x32xf32>, vector<2x32xf32> -> vector<8x32xf32>
    %c2_32 = arith.constant 2 : index
    %c0_33 = arith.constant 0 : index
    %c0_34 = arith.constant 0 : index
    %83 = vector.load %arg7[%c2_32, %c0_33, %c0_34] : memref<3x32x32xf32, #tpu.memory_space<vmem>>, vector<1x32x32xf32>
    %84 = vector.shape_cast %83 : vector<1x32x32xf32> to vector<32x32xf32>
    %cst_35 = arith.constant dense<0.000000e+00> : vector<8x32xf32>
    %85 = tpu.matmul %82, %84, %cst_35 {dimension_numbers = #tpu.dot_dimension_numbers<[1], [0], [0], [1], [0, 0, 1, 1], [], []>} : vector<8x32xf32>, vector<32x32xf32>, vector<8x32xf32> -> vector<8x32xf32>
    %86 = arith.addf %77, %85 : vector<8x32xf32>
    %c0_36 = arith.constant 0 : index
    %c0_37 = arith.constant 0 : index
    %87 = vector.load %arg8[%c0_36, %c0_37] : memref<1x32xf32, #tpu.memory_space<vmem>>, vector<1x32xf32>
    %88 = vector.broadcast %87 : vector<1x32xf32> to vector<8x32xf32>
    %89 = arith.addf %86, %88 : vector<8x32xf32>
    %cst_38 = arith.constant 0.000000e+00 : f32
    %90 = vector.broadcast %cst_38 : f32 to vector<8x32xf32>
    %91 = arith.cmpf ogt, %89, %90 : vector<8x32xf32>
    %cst_39 = arith.constant 0.000000e+00 : f32
    %92 = vector.broadcast %cst_39 : f32 to vector<8x32xf32>
    %93 = arith.minimumf %89, %92 : vector<8x32xf32>
    %94 = math.exp %93 : vector<8x32xf32>
    %cst_40 = arith.constant 1.000000e+00 : f32
    %95 = vector.broadcast %cst_40 : f32 to vector<8x32xf32>
    %96 = arith.subf %94, %95 : vector<8x32xf32>
    %97 = arith.select %91, %89, %96 : vector<8x32xi1>, vector<8x32xf32>
    %98 = vector.extract_strided_slice %97 {offsets = [6, 0], sizes = [2, 32], strides = [1, 1]} : vector<8x32xf32> to vector<2x32xf32>
    %99 = vector.extract_strided_slice %97 {offsets = [2, 0], sizes = [2, 32], strides = [1, 1]} : vector<8x32xf32> to vector<2x32xf32>
    %100 = tpu.concatenate %98, %99 in 0 : vector<2x32xf32>, vector<2x32xf32> -> vector<4x32xf32>
    %c0_41 = arith.constant 0 : index
    %c0_42 = arith.constant 0 : index
    %c0_43 = arith.constant 0 : index
    %101 = vector.load %arg9[%c0_41, %c0_42, %c0_43] : memref<3x32x64xf32, #tpu.memory_space<vmem>>, vector<1x32x64xf32>
    %102 = vector.shape_cast %101 : vector<1x32x64xf32> to vector<32x64xf32>
    %cst_44 = arith.constant dense<0.000000e+00> : vector<4x64xf32>
    %103 = tpu.matmul %100, %102, %cst_44 {dimension_numbers = #tpu.dot_dimension_numbers<[1], [0], [0], [1], [0, 0, 1, 1], [], []>} : vector<4x32xf32>, vector<32x64xf32>, vector<4x64xf32> -> vector<4x64xf32>
    %104 = vector.extract_strided_slice %97 {offsets = [0, 0], sizes = [2, 32], strides = [1, 1]} : vector<8x32xf32> to vector<2x32xf32>
    %105 = vector.extract_strided_slice %97 {offsets = [4, 0], sizes = [2, 32], strides = [1, 1]} : vector<8x32xf32> to vector<2x32xf32>
    %106 = tpu.concatenate %104, %105 in 0 : vector<2x32xf32>, vector<2x32xf32> -> vector<4x32xf32>
    %c1_45 = arith.constant 1 : index
    %c0_46 = arith.constant 0 : index
    %c0_47 = arith.constant 0 : index
    %107 = vector.load %arg9[%c1_45, %c0_46, %c0_47] : memref<3x32x64xf32, #tpu.memory_space<vmem>>, vector<1x32x64xf32>
    %108 = vector.shape_cast %107 : vector<1x32x64xf32> to vector<32x64xf32>
    %cst_48 = arith.constant dense<0.000000e+00> : vector<4x64xf32>
    %109 = tpu.matmul %106, %108, %cst_48 {dimension_numbers = #tpu.dot_dimension_numbers<[1], [0], [0], [1], [0, 0, 1, 1], [], []>} : vector<4x32xf32>, vector<32x64xf32>, vector<4x64xf32> -> vector<4x64xf32>
    %110 = arith.addf %103, %109 : vector<4x64xf32>
    %111 = vector.extract_strided_slice %97 {offsets = [2, 0], sizes = [2, 32], strides = [1, 1]} : vector<8x32xf32> to vector<2x32xf32>
    %112 = vector.extract_strided_slice %97 {offsets = [6, 0], sizes = [2, 32], strides = [1, 1]} : vector<8x32xf32> to vector<2x32xf32>
    %113 = tpu.concatenate %111, %112 in 0 : vector<2x32xf32>, vector<2x32xf32> -> vector<4x32xf32>
    %c2_49 = arith.constant 2 : index
    %c0_50 = arith.constant 0 : index
    %c0_51 = arith.constant 0 : index
    %114 = vector.load %arg9[%c2_49, %c0_50, %c0_51] : memref<3x32x64xf32, #tpu.memory_space<vmem>>, vector<1x32x64xf32>
    %115 = vector.shape_cast %114 : vector<1x32x64xf32> to vector<32x64xf32>
    %cst_52 = arith.constant dense<0.000000e+00> : vector<4x64xf32>
    %116 = tpu.matmul %113, %115, %cst_52 {dimension_numbers = #tpu.dot_dimension_numbers<[1], [0], [0], [1], [0, 0, 1, 1], [], []>} : vector<4x32xf32>, vector<32x64xf32>, vector<4x64xf32> -> vector<4x64xf32>
    %117 = arith.addf %110, %116 : vector<4x64xf32>
    %c0_53 = arith.constant 0 : index
    %c0_54 = arith.constant 0 : index
    %118 = vector.load %arg10[%c0_53, %c0_54] : memref<1x64xf32, #tpu.memory_space<vmem>>, vector<1x64xf32>
    %119 = vector.broadcast %118 : vector<1x64xf32> to vector<4x64xf32>
    %120 = arith.addf %117, %119 : vector<4x64xf32>
    %cst_55 = arith.constant 0.000000e+00 : f32
    %121 = vector.broadcast %cst_55 : f32 to vector<4x64xf32>
    %122 = arith.cmpf ogt, %120, %121 : vector<4x64xf32>
    %cst_56 = arith.constant 0.000000e+00 : f32
    %123 = vector.broadcast %cst_56 : f32 to vector<4x64xf32>
    %124 = arith.minimumf %120, %123 : vector<4x64xf32>
    %125 = math.exp %124 : vector<4x64xf32>
    %cst_57 = arith.constant 1.000000e+00 : f32
    %126 = vector.broadcast %cst_57 : f32 to vector<4x64xf32>
    %127 = arith.subf %125, %126 : vector<4x64xf32>
    %128 = arith.select %122, %120, %127 : vector<4x64xi1>, vector<4x64xf32>
    %129 = vector.extract_strided_slice %128 {offsets = [2, 0], sizes = [2, 64], strides = [1, 1]} : vector<4x64xf32> to vector<2x64xf32>
    %c0_58 = arith.constant 0 : index
    %c0_59 = arith.constant 0 : index
    %c0_60 = arith.constant 0 : index
    %130 = vector.load %arg11[%c0_58, %c0_59, %c0_60] : memref<3x64x64xf32, #tpu.memory_space<vmem>>, vector<1x64x64xf32>
    %131 = vector.shape_cast %130 : vector<1x64x64xf32> to vector<64x64xf32>
    %cst_61 = arith.constant dense<0.000000e+00> : vector<2x64xf32>
    %132 = tpu.matmul %129, %131, %cst_61 {dimension_numbers = #tpu.dot_dimension_numbers<[1], [0], [0], [1], [0, 0, 1, 1], [], []>} : vector<2x64xf32>, vector<64x64xf32>, vector<2x64xf32> -> vector<2x64xf32>
    %133 = vector.extract_strided_slice %128 {offsets = [0, 0], sizes = [2, 64], strides = [1, 1]} : vector<4x64xf32> to vector<2x64xf32>
    %c1_62 = arith.constant 1 : index
    %c0_63 = arith.constant 0 : index
    %c0_64 = arith.constant 0 : index
    %134 = vector.load %arg11[%c1_62, %c0_63, %c0_64] : memref<3x64x64xf32, #tpu.memory_space<vmem>>, vector<1x64x64xf32>
    %135 = vector.shape_cast %134 : vector<1x64x64xf32> to vector<64x64xf32>
    %cst_65 = arith.constant dense<0.000000e+00> : vector<2x64xf32>
    %136 = tpu.matmul %133, %135, %cst_65 {dimension_numbers = #tpu.dot_dimension_numbers<[1], [0], [0], [1], [0, 0, 1, 1], [], []>} : vector<2x64xf32>, vector<64x64xf32>, vector<2x64xf32> -> vector<2x64xf32>
    %137 = arith.addf %132, %136 : vector<2x64xf32>
    %138 = vector.extract_strided_slice %128 {offsets = [2, 0], sizes = [2, 64], strides = [1, 1]} : vector<4x64xf32> to vector<2x64xf32>
    %c2_66 = arith.constant 2 : index
    %c0_67 = arith.constant 0 : index
    %c0_68 = arith.constant 0 : index
    %139 = vector.load %arg11[%c2_66, %c0_67, %c0_68] : memref<3x64x64xf32, #tpu.memory_space<vmem>>, vector<1x64x64xf32>
    %140 = vector.shape_cast %139 : vector<1x64x64xf32> to vector<64x64xf32>
    %cst_69 = arith.constant dense<0.000000e+00> : vector<2x64xf32>
    %141 = tpu.matmul %138, %140, %cst_69 {dimension_numbers = #tpu.dot_dimension_numbers<[1], [0], [0], [1], [0, 0, 1, 1], [], []>} : vector<2x64xf32>, vector<64x64xf32>, vector<2x64xf32> -> vector<2x64xf32>
    %142 = arith.addf %137, %141 : vector<2x64xf32>
    %c0_70 = arith.constant 0 : index
    %c0_71 = arith.constant 0 : index
    %143 = vector.load %arg12[%c0_70, %c0_71] : memref<1x64xf32, #tpu.memory_space<vmem>>, vector<1x64xf32>
    %144 = vector.broadcast %143 : vector<1x64xf32> to vector<2x64xf32>
    %145 = arith.addf %142, %144 : vector<2x64xf32>
    %cst_72 = arith.constant 0.000000e+00 : f32
    %146 = vector.broadcast %cst_72 : f32 to vector<2x64xf32>
    %147 = arith.cmpf ogt, %145, %146 : vector<2x64xf32>
    %cst_73 = arith.constant 0.000000e+00 : f32
    %148 = vector.broadcast %cst_73 : f32 to vector<2x64xf32>
    %149 = arith.minimumf %145, %148 : vector<2x64xf32>
    %150 = math.exp %149 : vector<2x64xf32>
    %cst_74 = arith.constant 1.000000e+00 : f32
    %151 = vector.broadcast %cst_74 : f32 to vector<2x64xf32>
    %152 = arith.subf %150, %151 : vector<2x64xf32>
    %153 = arith.select %147, %145, %152 : vector<2x64xi1>, vector<2x64xf32>
    %c0_75 = arith.constant 0 : index
    %c0_76 = arith.constant 0 : index
    %154 = vector.load %arg13[%c0_75, %c0_76] : memref<64x128xf32, #tpu.memory_space<vmem>>, vector<64x128xf32>
    %cst_77 = arith.constant dense<0.000000e+00> : vector<2x128xf32>
    %155 = tpu.matmul %153, %154, %cst_77 {dimension_numbers = #tpu.dot_dimension_numbers<[1], [0], [0], [1], [0, 0, 1, 1], [], []>} : vector<2x64xf32>, vector<64x128xf32>, vector<2x128xf32> -> vector<2x128xf32>
    %c0_78 = arith.constant 0 : index
    %c0_79 = arith.constant 0 : index
    %156 = vector.load %arg14[%c0_78, %c0_79] : memref<8x128xf32, #tpu.memory_space<vmem>>, vector<8x128xf32>
    %cst_80 = arith.constant dense<0.000000e+00> : vector<2x128xf32>
    %157 = tpu.matmul %7, %156, %cst_80 {dimension_numbers = #tpu.dot_dimension_numbers<[1], [0], [0], [1], [0, 0, 1, 1], [], []>} : vector<2x8xf32>, vector<8x128xf32>, vector<2x128xf32> -> vector<2x128xf32>
    %158 = arith.addf %155, %157 : vector<2x128xf32>
    %c0_81 = arith.constant 0 : index
    %c0_82 = arith.constant 0 : index
    %159 = vector.load %arg15[%c0_81, %c0_82] : memref<1x128xf32, #tpu.memory_space<vmem>>, vector<1x128xf32>
    %160 = vector.broadcast %159 : vector<1x128xf32> to vector<2x128xf32>
    %161 = arith.addf %158, %160 : vector<2x128xf32>
    %cst_83 = arith.constant 0.000000e+00 : f32
    %162 = vector.broadcast %cst_83 : f32 to vector<2x128xf32>
    %163 = arith.cmpf ogt, %161, %162 : vector<2x128xf32>
    %cst_84 = arith.constant 0.000000e+00 : f32
    %164 = vector.broadcast %cst_84 : f32 to vector<2x128xf32>
    %165 = arith.minimumf %161, %164 : vector<2x128xf32>
    %166 = math.exp %165 : vector<2x128xf32>
    %cst_85 = arith.constant 1.000000e+00 : f32
    %167 = vector.broadcast %cst_85 : f32 to vector<2x128xf32>
    %168 = arith.subf %166, %167 : vector<2x128xf32>
    %169 = arith.select %163, %161, %168 : vector<2x128xi1>, vector<2x128xf32>
    %c0_86 = arith.constant 0 : index
    %c0_87 = arith.constant 0 : index
    %170 = vector.load %arg16[%c0_86, %c0_87] : memref<128x32xf32, #tpu.memory_space<vmem>>, vector<128x32xf32>
    %cst_88 = arith.constant dense<0.000000e+00> : vector<2x32xf32>
    %171 = tpu.matmul %169, %170, %cst_88 {dimension_numbers = #tpu.dot_dimension_numbers<[1], [0], [0], [1], [0, 0, 1, 1], [], []>} : vector<2x128xf32>, vector<128x32xf32>, vector<2x32xf32> -> vector<2x32xf32>
    %c0_89 = arith.constant 0 : index
    %c0_90 = arith.constant 0 : index
    %172 = vector.load %arg17[%c0_89, %c0_90] : memref<1x32xf32, #tpu.memory_space<vmem>>, vector<1x32xf32>
    %173 = vector.broadcast %172 : vector<1x32xf32> to vector<2x32xf32>
    %174 = arith.addf %171, %173 : vector<2x32xf32>
    %c0_91 = arith.constant 0 : index
    %c0_92 = arith.constant 0 : index
    %175 = vector.load %arg18[%c0_91, %c0_92] : memref<2x32xf32, #tpu.memory_space<vmem>>, vector<2x32xf32>
    tpu.vector_store %arg18[%c0_91, %c0_92], %174 {strides = array<i32>} : memref<2x32xf32, #tpu.memory_space<vmem>>, vector<2x32xf32>,
    return
  }
}

</mosaic_0001>

<llo_original>
// kernel: tpu_custom_call.1
$region0: #{tpu_custom_call.1}
  #allocation0 [shape = 'u32[]', space=smem, size = 0x4, offset = 0x4, fixed_abs, tag = 'smem constant byte address 0x4 - core index']
  #allocation1 [shape = 'u32[144,128]{1,0:T(1,128)}', space=vmem, size = 0x12000, scoped, tag = 'internal scratch']
  %s0 = inlined_call_operand.hbm [shape: f32[32,26], index: 0, kind: input, shape index: {}]
  %s1 = inlined_call_operand.hbm [shape: f32[2,8], index: 1, kind: input, shape index: {}]
  %s2 = inlined_call_operand.vmem [shape: f32[1,26], index: 2, kind: input, shape index: {}]
  %s3 = inlined_call_operand.hbm [shape: f32[1,26], index: 3, kind: input, shape index: {}]
  %s4 = inlined_call_operand.hbm [shape: f32[3,26,32], index: 4, kind: input, shape index: {}]
  %s5 = inlined_call_operand.vmem [shape: f32[8,32], index: 5, kind: input, shape index: {}]
  %s6 = inlined_call_operand.hbm [shape: f32[1,32], index: 6, kind: input, shape index: {}]
  %s7 = inlined_call_operand.hbm [shape: f32[3,32,32], index: 7, kind: input, shape index: {}]
  %s8 = inlined_call_operand.hbm [shape: f32[1,32], index: 8, kind: input, shape index: {}]
  %s9 = inlined_call_operand.hbm [shape: f32[3,32,64], index: 9, kind: input, shape index: {}]
  %s10 = inlined_call_operand.hbm [shape: f32[1,64], index: 10, kind: input, shape index: {}]
  %s11 = inlined_call_operand.vmem [shape: f32[3,64,64], index: 11, kind: input, shape index: {}]
  %s12 = inlined_call_operand.hbm [shape: f32[1,64], index: 12, kind: input, shape index: {}]
  %s13 = inlined_call_operand.hbm [shape: f32[64,128], index: 13, kind: input, shape index: {}]
  %s14 = inlined_call_operand.vmem [shape: f32[8,128], index: 14, kind: input, shape index: {}]
  %s15 = inlined_call_operand.vmem [shape: f32[1,128], index: 15, kind: input, shape index: {}]
  %s16 = inlined_call_operand.vmem [shape: f32[128,32], index: 16, kind: input, shape index: {}]
  %s17 = inlined_call_operand.vmem [shape: f32[1,32], index: 17, kind: input, shape index: {}]
  %s18 = inlined_call_operand.hbm [shape: f32[2,32], index: 18, kind: output, shape index: {}]
  %s19 = sld [smem:[#allocation0]]
  $region126: #{tpu_custom_call.1} parent=0
    _
  %s21 = ssub.s32 1, %s19
  %s22 = scalar_select 0, %s21, %s19
  $region1: #{tpu_custom_call.1} parent=0
    #allocation2 [shape = 'u8[16384]{0}', space=vmem, size = 0x4000, scoped, tag = 'input window, operand 0, single buffered']
    #allocation3 [shape = 's32[1]{0}', space=sflag, size = 0x4, scoped, tag = 'scoped memory for tpu_custom_call.1']
    #allocation4 [shape = 's32[1]{0}', space=sflag, size = 0x4, scoped, tag = 'scoped memory for tpu_custom_call.1']
    #allocation5 [shape = 'u8[1024]{0}', space=vmem, size = 0x400, scoped, tag = 'input window, operand 1, single buffered']
    #allocation6 [shape = 's32[1]{0}', space=sflag, size = 0x4, scoped, tag = 'scoped memory for tpu_custom_call.1']
    #allocation7 [shape = 'u8[512]{0}', space=vmem, size = 0x400, scoped, tag = 'input window, operand 3, single buffered']
    #allocation8 [shape = 'u8[49152]{0}', space=vmem, size = 0xc000, scoped, tag = 'input window, operand 4, single buffered']
    #allocation9 [shape = 's32[1]{0}', space=sflag, size = 0x4, scoped, tag = 'scoped memory for tpu_custom_call.1']
    #allocation10 [shape = 'u8[512]{0}', space=vmem, size = 0x400, scoped, tag = 'input window, operand 6, single buffered']
    #allocation11 [shape = 'u8[49152]{0}', space=vmem, size = 0xc000, scoped, tag = 'input window, operand 7, single buffered']
    #allocation12 [shape = 's32[1]{0}', space=sflag, size = 0x4, scoped, tag = 'scoped memory for tpu_custom_call.1']
    #allocation13 [shape = 'u8[512]{0}', space=vmem, size = 0x400, scoped, tag = 'input window, operand 8, single buffered']
    #allocation14 [shape = 'u8[49152]{0}', space=vmem, size = 0xc000, scoped, tag = 'input window, operand 9, single buffered']
    #allocation15 [shape = 's32[1]{0}', space=sflag, size = 0x4, scoped, tag = 'scoped memory for tpu_custom_call.1']
    #allocation16 [shape = 'u8[512]{0}', space=vmem, size = 0x400, scoped, tag = 'input window, operand 10, single buffered']
    #allocation17 [shape = 'u8[512]{0}', space=vmem, size = 0x400, scoped, tag = 'input window, operand 12, single buffered']
    #allocation18 [shape = 's32[1]{0}', space=sflag, size = 0x4, scoped, tag = 'scoped memory for tpu_custom_call.1']
    #allocation19 [shape = 'u8[32768]{0}', space=vmem, size = 0x8000, scoped, tag = 'input window, operand 13, single buffered']
    #allocation20 [shape = 'u8[1024]{0}', space=vmem, size = 0x400, scoped, tag = 'output window, operand 0, single buffered']
    %23 = vsyncpa [#allocation3], 0
    %24 = vsyncpa [#allocation6], 0
    %25 = vsyncpa [#allocation9], 0
    %26 = vsyncpa [#allocation12], 0
    %27 = vsyncpa [#allocation15], 0
    %28 = vsyncpa [#allocation18], 0
    %29 = vsyncpa [#allocation4], 0
    // Predicated region
    $region2: #{tpu_custom_call.1} parent=1 // pred_check
      _
    $region3: #{tpu_custom_call.1} parent=1 // pred_check_branch
      %31 = sbr.rel (0) target = $region5
    $region4: #{tpu_custom_call.1} parent=1 // pred_region
      %s33 = ssub.s32 512, 512
      %34 = vsyncadd [#allocation3], %s33
      %s35 = sshll.u32 [#allocation2], 4
      %s36 = int_to_ptr.vmem [resolvable:$true] %s35
      %41 = dma.hbm_to_vmem [thread:$0]  %s0, 512, %s36, [#allocation3], 128, 128, 8
    $region5: #{tpu_custom_call.1} parent=1 // pred_fallthru
      _
    // Predicated region
    $region6: #{tpu_custom_call.1} parent=1 // pred_check
      _
    $region7: #{tpu_custom_call.1} parent=1 // pred_check_branch
      %43 = sbr.rel (0) target = $region9
    $region8: #{tpu_custom_call.1} parent=1 // pred_region
      %s45 = ssub.s32 32, 32
      %46 = vsyncadd [#allocation6], %s45
      %s48 = sshll.u32 [#allocation5], 4
      %s49 = int_to_ptr.vmem [resolvable:$true] %s48
      %51 = dma.hbm_to_vmem [thread:$0]  %s1, 32, %s49, [#allocation6]
    $region9: #{tpu_custom_call.1} parent=1 // pred_fallthru
      _
    // Predicated region
    $region10: #{tpu_custom_call.1} parent=1 // pred_check
      _
    $region11: #{tpu_custom_call.1} parent=1 // pred_check_branch
      %53 = sbr.rel (0) target = $region13
    $region12: #{tpu_custom_call.1} parent=1 // pred_region
      _
    $region13: #{tpu_custom_call.1} parent=1 // pred_fallthru
      _
    // Predicated region
    $region14: #{tpu_custom_call.1} parent=1 // pred_check
      _
    $region15: #{tpu_custom_call.1} parent=1 // pred_check_branch
      %55 = sbr.rel (0) target = $region17
    $region16: #{tpu_custom_call.1} parent=1 // pred_region
      %s57 = ssub.s32 16, 16
      %58 = vsyncadd [#allocation6], %s57
      %s60 = sshll.u32 [#allocation7], 4
      %s61 = int_to_ptr.vmem [resolvable:$true] %s60
      %63 = dma.hbm_to_vmem [thread:$0]  %s3, 16, %s61, [#allocation6]
    $region17: #{tpu_custom_call.1} parent=1 // pred_fallthru
      _
    // Predicated region
    $region18: #{tpu_custom_call.1} parent=1 // pred_check
      _
    $region19: #{tpu_custom_call.1} parent=1 // pred_check_branch
      %65 = sbr.rel (0) target = $region21
    $region20: #{tpu_custom_call.1} parent=1 // pred_region
      %s67 = ssub.s32 1536, 1536
      %68 = vsyncadd [#allocation9], %s67
      %s69 = sshll.u32 [#allocation8], 4
      %s70 = int_to_ptr.vmem [resolvable:$true] %s69
      %75 = dma.hbm_to_vmem [thread:$0]  %s4, 1536, %s70, [#allocation9], 128, 128, 8
    $region21: #{tpu_custom_call.1} parent=1 // pred_fallthru
      _
    // Predicated region
    $region22: #{tpu_custom_call.1} parent=1 // pred_check
      _
    $region23: #{tpu_custom_call.1} parent=1 // pred_check_branch
      %77 = sbr.rel (0) target = $region25
    $region24: #{tpu_custom_call.1} parent=1 // pred_region
      _
    $region25: #{tpu_custom_call.1} parent=1 // pred_fallthru
      _
    // Predicated region
    $region26: #{tpu_custom_call.1} parent=1 // pred_check
      _
    $region27: #{tpu_custom_call.1} parent=1 // pred_check_branch
      %79 = sbr.rel (0) target = $region29
    $region28: #{tpu_custom_call.1} parent=1 // pred_region
      %s81 = ssub.s32 16, 16
      %82 = vsyncadd [#allocation9], %s81
      %s84 = sshll.u32 [#allocation10], 4
      %s85 = int_to_ptr.vmem [resolvable:$true] %s84
      %87 = dma.hbm_to_vmem [thread:$0]  %s6, 16, %s85, [#allocation9]
    $region29: #{tpu_custom_call.1} parent=1 // pred_fallthru
      _
    // Predicated region
    $region30: #{tpu_custom_call.1} parent=1 // pred_check
      _
    $region31: #{tpu_custom_call.1} parent=1 // pred_check_branch
      %89 = sbr.rel (0) target = $region33
    $region32: #{tpu_custom_call.1} parent=1 // pred_region
      %s91 = ssub.s32 1536, 1536
      %92 = vsyncadd [#allocation12], %s91
      %s93 = sshll.u32 [#allocation11], 4
      %s94 = int_to_ptr.vmem [resolvable:$true] %s93
      %99 = dma.hbm_to_vmem [thread:$0]  %s7, 1536, %s94, [#allocation12], 128, 128, 8
    $region33: #{tpu_custom_call.1} parent=1 // pred_fallthru
      _
    // Predicated region
    $region34: #{tpu_custom_call.1} parent=1 // pred_check
      _
    $region35: #{tpu_custom_call.1} parent=1 // pred_check_branch
      %101 = sbr.rel (0) target = $region37
    $region36: #{tpu_custom_call.1} parent=1 // pred_region
      %s103 = ssub.s32 16, 16
      %104 = vsyncadd [#allocation12], %s103
      %s106 = sshll.u32 [#allocation13], 4
      %s107 = int_to_ptr.vmem [resolvable:$true] %s106
      %109 = dma.hbm_to_vmem [thread:$0]  %s8, 16, %s107, [#allocation12]
    $region37: #{tpu_custom_call.1} parent=1 // pred_fallthru
      _
    // Predicated region
    $region38: #{tpu_custom_call.1} parent=1 // pred_check
      _
    $region39: #{tpu_custom_call.1} parent=1 // pred_check_branch
      %111 = sbr.rel (0) target = $region41
    $region40: #{tpu_custom_call.1} parent=1 // pred_region
      %s113 = ssub.s32 1536, 1536
      %114 = vsyncadd [#allocation15], %s113
      %s115 = sshll.u32 [#allocation14], 4
      %s116 = int_to_ptr.vmem [resolvable:$true] %s115
      %121 = dma.hbm_to_vmem [thread:$0]  %s9, 1536, %s116, [#allocation15], 128, 128, 8
    $region41: #{tpu_custom_call.1} parent=1 // pred_fallthru
      _
    // Predicated region
    $region42: #{tpu_custom_call.1} parent=1 // pred_check
      _
    $region43: #{tpu_custom_call.1} parent=1 // pred_check_branch
      %123 = sbr.rel (0) target = $region45
    $region44: #{tpu_custom_call.1} parent=1 // pred_region
      %s125 = ssub.s32 16, 16
      %126 = vsyncadd [#allocation15], %s125
      %s128 = sshll.u32 [#allocation16], 4
      %s129 = int_to_ptr.vmem [resolvable:$true] %s128
      %131 = dma.hbm_to_vmem [thread:$0]  %s10, 16, %s129, [#allocation15]
    $region45: #{tpu_custom_call.1} parent=1 // pred_fallthru
      _
    // Predicated region
    $region46: #{tpu_custom_call.1} parent=1 // pred_check
      _
    $region47: #{tpu_custom_call.1} parent=1 // pred_check_branch
      %133 = sbr.rel (0) target = $region49
    $region48: #{tpu_custom_call.1} parent=1 // pred_region
      _
    $region49: #{tpu_custom_call.1} parent=1 // pred_fallthru
      _
    // Predicated region
    $region50: #{tpu_custom_call.1} parent=1 // pred_check
      _
    $region51: #{tpu_custom_call.1} parent=1 // pred_check_branch
      %135 = sbr.rel (0) target = $region53
    $region52: #{tpu_custom_call.1} parent=1 // pred_region
      %s137 = ssub.s32 16, 16
      %138 = vsyncadd [#allocation18], %s137
      %s140 = sshll.u32 [#allocation17], 4
      %s141 = int_to_ptr.vmem [resolvable:$true] %s140
      %143 = dma.hbm_to_vmem [thread:$0]  %s12, 16, %s141, [#allocation18]
    $region53: #{tpu_custom_call.1} parent=1 // pred_fallthru
      _
    // Predicated region
    $region54: #{tpu_custom_call.1} parent=1 // pred_check
      _
    $region55: #{tpu_custom_call.1} parent=1 // pred_check_branch
      %145 = sbr.rel (0) target = $region57
    $region56: #{tpu_custom_call.1} parent=1 // pred_region
      %s147 = ssub.s32 1024, 1024
      %148 = vsyncadd [#allocation18], %s147
      %s149 = sshll.u32 [#allocation19], 4
      %s150 = int_to_ptr.vmem [resolvable:$true] %s149
      %155 = dma.hbm_to_vmem [thread:$0]  %s13, 1024, %s150, [#allocation18], 128, 128, 8
    $region57: #{tpu_custom_call.1} parent=1 // pred_fallthru
      _
    // Predicated region
    $region58: #{tpu_custom_call.1} parent=1 // pred_check
      _
    $region59: #{tpu_custom_call.1} parent=1 // pred_check_branch
      %157 = sbr.rel (0) target = $region61
    $region60: #{tpu_custom_call.1} parent=1 // pred_region
      _
    $region61: #{tpu_custom_call.1} parent=1 // pred_fallthru
      _
    // Predicated region
    $region62: #{tpu_custom_call.1} parent=1 // pred_check
      _
    $region63: #{tpu_custom_call.1} parent=1 // pred_check_branch
      %159 = sbr.rel (0) target = $region65
    $region64: #{tpu_custom_call.1} parent=1 // pred_region
      _
    $region65: #{tpu_custom_call.1} parent=1 // pred_fallthru
      _
    // Predicated region
    $region66: #{tpu_custom_call.1} parent=1 // pred_check
      _
    $region67: #{tpu_custom_call.1} parent=1 // pred_check_branch
      %161 = sbr.rel (0) target = $region69
    $region68: #{tpu_custom_call.1} parent=1 // pred_region
      _
    $region69: #{tpu_custom_call.1} parent=1 // pred_fallthru
      _
    // Predicated region
    $region70: #{tpu_custom_call.1} parent=1 // pred_check
      _
    $region71: #{tpu_custom_call.1} parent=1 // pred_check_branch
      %163 = sbr.rel (0) target = $region73
    $region72: #{tpu_custom_call.1} parent=1 // pred_region
      _
    $region73: #{tpu_custom_call.1} parent=1 // pred_fallthru
      _
    // Predicated region
    $region74: #{tpu_custom_call.1} parent=1 // pred_check
      _
    $region75: #{tpu_custom_call.1} parent=1 // pred_check_branch
      %165 = sbr.rel (0) target = $region77
    $region76: #{tpu_custom_call.1} parent=1 // pred_region
      %166 = dma.done [#allocation3], 512
    $region77: #{tpu_custom_call.1} parent=1 // pred_fallthru
      _
    // Predicated region
    $region78: #{tpu_custom_call.1} parent=1 // pred_check
      _
    $region79: #{tpu_custom_call.1} parent=1 // pred_check_branch
      %168 = sbr.rel (0) target = $region81
    $region80: #{tpu_custom_call.1} parent=1 // pred_region
      %169 = dma.done [#allocation6], 32
    $region81: #{tpu_custom_call.1} parent=1 // pred_fallthru
      _
    // Predicated region
    $region82: #{tpu_custom_call.1} parent=1 // pred_check
      _
    $region83: #{tpu_custom_call.1} parent=1 // pred_check_branch
      %171 = sbr.rel (0) target = $region85
    $region84: #{tpu_custom_call.1} parent=1 // pred_region
      %172 = dma.done [#allocation6], 16
    $region85: #{tpu_custom_call.1} parent=1 // pred_fallthru
      _
    // Predicated region
    $region86: #{tpu_custom_call.1} parent=1 // pred_check
      _
    $region87: #{tpu_custom_call.1} parent=1 // pred_check_branch
      %174 = sbr.rel (0) target = $region89
    $region88: #{tpu_custom_call.1} parent=1 // pred_region
      %175 = dma.done [#allocation9], 1536
    $region89: #{tpu_custom_call.1} parent=1 // pred_fallthru
      _
    // Predicated region
    $region90: #{tpu_custom_call.1} parent=1 // pred_check
      _
    $region91: #{tpu_custom_call.1} parent=1 // pred_check_branch
      %177 = sbr.rel (0) target = $region93
    $region92: #{tpu_custom_call.1} parent=1 // pred_region
      %178 = dma.done [#allocation9], 16
    $region93: #{tpu_custom_call.1} parent=1 // pred_fallthru
      _
    // Predicated region
    $region94: #{tpu_custom_call.1} parent=1 // pred_check
      _
    $region95: #{tpu_custom_call.1} parent=1 // pred_check_branch
      %180 = sbr.rel (0) target = $region97
    $region96: #{tpu_custom_call.1} parent=1 // pred_region
      %181 = dma.done [#allocation12], 1536
    $region97: #{tpu_custom_call.1} parent=1 // pred_fallthru
      _
    // Predicated region
    $region98: #{tpu_custom_call.1} parent=1 // pred_check
      _
    $region99: #{tpu_custom_call.1} parent=1 // pred_check_branch
      %183 = sbr.rel (0) target = $region101
    $region100: #{tpu_custom_call.1} parent=1 // pred_region
      %184 = dma.done [#allocation12], 16
    $region101: #{tpu_custom_call.1} parent=1 // pred_fallthru
      _
    // Predicated region
    $region102: #{tpu_custom_call.1} parent=1 // pred_check
      _
    $region103: #{tpu_custom_call.1} parent=1 // pred_check_branch
      %186 = sbr.rel (0) target = $region105
    $region104: #{tpu_custom_call.1} parent=1 // pred_region
      %187 = dma.done [#allocation15], 1536
    $region105: #{tpu_custom_call.1} parent=1 // pred_fallthru
      _
    // Predicated region
    $region106: #{tpu_custom_call.1} parent=1 // pred_check
      _
    $region107: #{tpu_custom_call.1} parent=1 // pred_check_branch
      %189 = sbr.rel (0) target = $region109
    $region108: #{tpu_custom_call.1} parent=1 // pred_region
      %190 = dma.done [#allocation15], 16
    $region109: #{tpu_custom_call.1} parent=1 // pred_fallthru
      _
    // Predicated region
    $region110: #{tpu_custom_call.1} parent=1 // pred_check
      _
    $region111: #{tpu_custom_call.1} parent=1 // pred_check_branch
      %192 = sbr.rel (0) target = $region113
    $region112: #{tpu_custom_call.1} parent=1 // pred_region
      %193 = dma.done [#allocation18], 16
    $region113: #{tpu_custom_call.1} parent=1 // pred_fallthru
      _
    // Predicated region
    $region114: #{tpu_custom_call.1} parent=1 // pred_check
      _
    $region115: #{tpu_custom_call.1} parent=1 // pred_check_branch
      %195 = sbr.rel (0) target = $region117
    $region116: #{tpu_custom_call.1} parent=1 // pred_region
      %196 = dma.done [#allocation18], 1024
    $region117: #{tpu_custom_call.1} parent=1 // pred_fallthru
      _
    %v197 = vld [vmem:[#allocation2] sm:$0xff]
    %v198 = vld [vmem:[#allocation2 + $0x8] sm:$0xff]
    %v199 = vld [vmem:[#allocation2 + $0x10] sm:$0xff]
    %v200 = vld [vmem:[#allocation2 + $0x18] sm:$0xff]
    %v201 = vld [vmem:[%s2] sm:$0x1]
    %v203 = vlaneseq
    %v204 = vshrl.u32 %v203, 7
    %v205 = vsub.s32 0, %v204
    %v206 = vrot.slane %v201, %v205
    %v208 = vmul.f32 %v197, %v206
    %v209 = vmul.f32 %v198, %v206
    %v210 = vmul.f32 %v199, %v206
    %v211 = vmul.f32 %v200, %v206
    %v212 = vld [vmem:[#allocation7] sm:$0x1]
    %v214 = vlaneseq
    %v215 = vshrl.u32 %v214, 7
    %v216 = vsub.s32 0, %v215
    %v217 = vrot.slane %v212, %v216
    %v219 = vadd.f32 %v208, %v217
    %v220 = vadd.f32 %v209, %v217
    %v221 = vadd.f32 %v210, %v217
    %v222 = vadd.f32 %v211, %v217
    %v223 = vld [vmem:[#allocation5] sm:$0x3]
    %v225 = vrot.slane %v222, 6
    %v228 = vrot.slane %v219, 2
    %v231 = vrot.slane %v220, 4
    %v233 = vrot.slane %v220, 6
    %v236 = vrot.slane %v221, 2
    %v238 = vrot.slane %v222, 4
    %vm240 = vcmask 1041408
    %v241 = vsel %vm240, %v225, %v219
    %vm242 = vcmask 1043456
    %v243 = vsel %vm242, %v241, %v228
    %vm244 = vcmask 1045504
    %v245 = vsel %vm244, %v243, %v231
    %v246 = vsel %vm240, %v233, %v221
    %v247 = vsel %vm242, %v246, %v236
    %v248 = vsel %vm244, %v247, %v238
    %v249 = vld [vmem:[#allocation8] sm:$0xff]
    %v250 = vld [vmem:[#allocation8 + $0x8] sm:$0xff]
    %v251 = vld [vmem:[#allocation8 + $0x10] sm:$0xff]
    %v252 = vld [vmem:[#allocation8 + $0x18] sm:$0x3]
    %v253 = vsel %vm240, %v219, %v228
    %v254 = vsel %vm242, %v253, %v231
    %v255 = vsel %vm244, %v254, %v233
    %v256 = vsel %vm240, %v221, %v236
    %v257 = vsel %vm242, %v256, %v238
    %v258 = vsel %vm244, %v257, %v225
    %s259 = scalar_lea.vmem [#allocation8], 32
    %v260 = vld [vmem:[%s259] sm:$0xff]
    %v261 = vld [vmem:[%s259 + $0x8] sm:$0xff]
    %v262 = vld [vmem:[%s259 + $0x10] sm:$0xff]
    %v263 = vld [vmem:[%s259 + $0x18] sm:$0x3]
    %vm264 = vcmask 211968
    %v266 = vsel %vm264, %v255, 0
    %v269 = vsel %vm264, %v258, 0
    %v272 = vsel %vm240, %v263, 0
    %274 = vmatprep.subr.mxu0 0.0
    %275 = vmatpush1.msra.mxu0 %v260
    %276 = vmatprep.subr.mxu0 0.0
    %277 = vmatpush1.msra.mxu0 %v261
    %278 = vmatprep.subr.mxu0 0.0
    %279 = vmatpush1.msra.mxu0 %v262
    %280 = vmatprep.subr.mxu0 0.0
    %281 = vmatpush1.msra.mxu0 %v272
    %282 = vmatprep.subr.mxu0 0.0
    %283 = vmatpush1.msra.mxu0 0.0
    %284 = vmatprep.subr.mxu0 0.0
    %285 = vmatpush1.msra.mxu0 0.0
    %286 = vmatprep.subr.mxu0 0.0
    %287 = vmatpush1.msra.mxu0 0.0
    %288 = vmatprep.subr.mxu0 0.0
    %289 = vmatpush1.msra.mxu0 0.0
    %290 = vmatprep.subr.mxu0 0.0
    %291 = vmatpush1.msra.mxu0 0.0
    %292 = vmatprep.subr.mxu0 0.0
    %293 = vmatpush1.msra.mxu0 0.0
    %294 = vmatprep.subr.mxu0 0.0
    %295 = vmatpush1.msra.mxu0 0.0
    %296 = vmatprep.subr.mxu0 0.0
    %297 = vmatpush1.msra.mxu0 0.0
    %298 = vmatprep.subr.mxu0 0.0
    %299 = vmatpush1.msra.mxu0 0.0
    %300 = vmatprep.subr.mxu0 0.0
    %301 = vmatpush1.msra.mxu0 0.0
    %302 = vmatprep.subr.mxu0 0.0
    %303 = vmatpush1.msra.mxu0 0.0
    %304 = vmatprep.subr.mxu0 0.0
    %305 = vmatpush1.msra.mxu0 0.0
    %306 = vmatprep.subr.mxu0 0.0
    %307 = vmatpush1.msra.mxu0 0.0
    %308 = vmatprep.subr.mxu0 0.0
    %309 = vmatpush1.msra.mxu0 0.0
    %310 = vmatprep.subr.mxu0 0.0
    %311 = vmatpush1.msra.mxu0 0.0
    %312 = vmatprep.subr.mxu0 0.0
    %313 = vmatpush1.msra.mxu0 0.0
    %314 = vmatprep.subr.mxu0 0.0
    %315 = vmatpush1.msra.mxu0 0.0
    %316 = vmatprep.subr.mxu0 0.0
    %317 = vmatpush1.msra.mxu0 0.0
    %318 = vmatprep.subr.mxu0 0.0
    %319 = vmatpush1.msra.mxu0 0.0
    %320 = vmatprep.subr.mxu0 0.0
    %321 = vmatpush1.msra.mxu0 0.0
    %322 = vmatprep.subr.mxu0 0.0
    %323 = vmatpush1.msra.mxu0 0.0
    %324 = vmatprep.subr.mxu0 0.0
    %325 = vmatpush1.msra.mxu0 0.0
    %326 = vmatprep.subr.mxu0 0.0
    %327 = vmatpush1.msra.mxu0 0.0
    %328 = vmatprep.subr.mxu0 0.0
    %329 = vmatpush1.msra.mxu0 0.0
    %330 = vmatprep.subr.mxu0 0.0
    %331 = vmatpush1.msra.mxu0 0.0
    %332 = vmatprep.subr.mxu0 0.0
    %333 = vmatpush1.msra.mxu0 0.0
    %334 = vmatprep.subr.mxu0 0.0
    %335 = vmatpush1.msra.mxu0 0.0
    %336 = vmatprep.subr.mxu0 0.0
    %337 = vmatpush1.msra.mxu0 0.0
    %338 = vmatprep.mubr.f32.mxu0 0.0
    %339 = vmatmul.mubr.f32.gmra.mrb[0].mxu0 %v266
    %v340 = vpop.f32.mrb[0].mxu0
    %v341 = vadd.f32 0.0, %v340
    %v342 = vpop.f32.mrb[0].mxu0
    %343 = vmatprep.mubr.f32.mxu0 0.0
    %344 = vmatmul.mubr.f32.gmra.mrb[0].mxu0 %v269
    %v345 = vpop.f32.mrb[0].mxu0
    %v346 = vadd.f32 0.0, %v345
    %v347 = vpop.f32.mrb[0].mxu0
    %348 = vdwg.mxu0
    %v350 = vsel %vm264, %v245, 0
    %v353 = vsel %vm264, %v248, 0
    %v356 = vsel %vm240, %v252, 0
    %358 = vmatprep.subr.mxu0 0.0
    %359 = vmatpush1.msra.mxu0 %v249
    %360 = vmatprep.subr.mxu0 0.0
    %361 = vmatpush1.msra.mxu0 %v250
    %362 = vmatprep.subr.mxu0 0.0
    %363 = vmatpush1.msra.mxu0 %v251
    %364 = vmatprep.subr.mxu0 0.0
    %365 = vmatpush1.msra.mxu0 %v356
    %366 = vmatprep.subr.mxu0 0.0
    %367 = vmatpush1.msra.mxu0 0.0
    %368 = vmatprep.subr.mxu0 0.0
    %369 = vmatpush1.msra.mxu0 0.0
    %370 = vmatprep.subr.mxu0 0.0
    %371 = vmatpush1.msra.mxu0 0.0
    %372 = vmatprep.subr.mxu0 0.0
    %373 = vmatpush1.msra.mxu0 0.0
    %374 = vmatprep.subr.mxu0 0.0
    %375 = vmatpush1.msra.mxu0 0.0
    %376 = vmatprep.subr.mxu0 0.0
    %377 = vmatpush1.msra.mxu0 0.0
    %378 = vmatprep.subr.mxu0 0.0
    %379 = vmatpush1.msra.mxu0 0.0
    %380 = vmatprep.subr.mxu0 0.0
    %381 = vmatpush1.msra.mxu0 0.0
    %382 = vmatprep.subr.mxu0 0.0
    %383 = vmatpush1.msra.mxu0 0.0
    %384 = vmatprep.subr.mxu0 0.0
    %385 = vmatpush1.msra.mxu0 0.0
    %386 = vmatprep.subr.mxu0 0.0
    %387 = vmatpush1.msra.mxu0 0.0
    %388 = vmatprep.subr.mxu0 0.0
    %389 = vmatpush1.msra.mxu0 0.0
    %390 = vmatprep.subr.mxu0 0.0
    %391 = vmatpush1.msra.mxu0 0.0
    %392 = vmatprep.subr.mxu0 0.0
    %393 = vmatpush1.msra.mxu0 0.0
    %394 = vmatprep.subr.mxu0 0.0
    %395 = vmatpush1.msra.mxu0 0.0
    %396 = vmatprep.subr.mxu0 0.0
    %397 = vmatpush1.msra.mxu0 0.0
    %398 = vmatprep.subr.mxu0 0.0
    %399 = vmatpush1.msra.mxu0 0.0
    %400 = vmatprep.subr.mxu0 0.0
    %401 = vmatpush1.msra.mxu0 0.0
    %402 = vmatprep.subr.mxu0 0.0
    %403 = vmatpush1.msra.mxu0 0.0
    %404 = vmatprep.subr.mxu0 0.0
    %405 = vmatpush1.msra.mxu0 0.0
    %406 = vmatprep.subr.mxu0 0.0
    %407 = vmatpush1.msra.mxu0 0.0
    %408 = vmatprep.subr.mxu0 0.0
    %409 = vmatpush1.msra.mxu0 0.0
    %410 = vmatprep.subr.mxu0 0.0
    %411 = vmatpush1.msra.mxu0 0.0
    %412 = vmatprep.subr.mxu0 0.0
    %413 = vmatpush1.msra.mxu0 0.0
    %414 = vmatprep.subr.mxu0 0.0
    %415 = vmatpush1.msra.mxu0 0.0
    %416 = vmatprep.subr.mxu0 0.0
    %417 = vmatpush1.msra.mxu0 0.0
    %418 = vmatprep.subr.mxu0 0.0
    %419 = vmatpush1.msra.mxu0 0.0
    %420 = vmatprep.subr.mxu0 0.0
    %421 = vmatpush1.msra.mxu0 0.0
    %422 = vmatprep.mubr.f32.mxu0 0.0
    %423 = vmatmul.mubr.f32.gmra.mrb[0].mxu0 %v350
    %v424 = vpop.f32.mrb[0].mxu0
    %v425 = vadd.f32 %v341, %v424
    %v426 = vpop.f32.mrb[0].mxu0
    %427 = vmatprep.mubr.f32.mxu0 0.0
    %428 = vmatmul.mubr.f32.gmra.mrb[0].mxu0 %v353
    %v429 = vpop.f32.mrb[0].mxu0
    %v430 = vadd.f32 %v346, %v429
    %v431 = vpop.f32.mrb[0].mxu0
    %432 = vdwg.mxu0
    %v433 = vrot.slane %v219, 4
    %v435 = vrot.slane %v221, 4
    %v437 = vsel %vm240, %v228, %v433
    %v438 = vsel %vm242, %v437, %v233
    %v439 = vsel %vm244, %v438, %v220
    %v440 = vsel %vm240, %v236, %v435
    %v441 = vsel %vm242, %v440, %v225
    %v442 = vsel %vm244, %v441, %v222
    %s443 = scalar_lea.vmem [#allocation8], 64
    %v444 = vld [vmem:[%s443] sm:$0xff]
    %v445 = vld [vmem:[%s443 + $0x8] sm:$0xff]
    %v446 = vld [vmem:[%s443 + $0x10] sm:$0xff]
    %v447 = vld [vmem:[%s443 + $0x18] sm:$0x3]
    %v449 = vsel %vm264, %v439, 0
    %v452 = vsel %vm264, %v442, 0
    %v455 = vsel %vm240, %v447, 0
    %457 = vmatprep.subr.mxu0 0.0
    %458 = vmatpush1.msra.mxu0 %v444
    %459 = vmatprep.subr.mxu0 0.0
    %460 = vmatpush1.msra.mxu0 %v445
    %461 = vmatprep.subr.mxu0 0.0
    %462 = vmatpush1.msra.mxu0 %v446
    %463 = vmatprep.subr.mxu0 0.0
    %464 = vmatpush1.msra.mxu0 %v455
    %465 = vmatprep.subr.mxu0 0.0
    %466 = vmatpush1.msra.mxu0 0.0
    %467 = vmatprep.subr.mxu0 0.0
    %468 = vmatpush1.msra.mxu0 0.0
    %469 = vmatprep.subr.mxu0 0.0
    %470 = vmatpush1.msra.mxu0 0.0
    %471 = vmatprep.subr.mxu0 0.0
    %472 = vmatpush1.msra.mxu0 0.0
    %473 = vmatprep.subr.mxu0 0.0
    %474 = vmatpush1.msra.mxu0 0.0
    %475 = vmatprep.subr.mxu0 0.0
    %476 = vmatpush1.msra.mxu0 0.0
    %477 = vmatprep.subr.mxu0 0.0
    %478 = vmatpush1.msra.mxu0 0.0
    %479 = vmatprep.subr.mxu0 0.0
    %480 = vmatpush1.msra.mxu0 0.0
    %481 = vmatprep.subr.mxu0 0.0
    %482 = vmatpush1.msra.mxu0 0.0
    %483 = vmatprep.subr.mxu0 0.0
    %484 = vmatpush1.msra.mxu0 0.0
    %485 = vmatprep.subr.mxu0 0.0
    %486 = vmatpush1.msra.mxu0 0.0
    %487 = vmatprep.subr.mxu0 0.0
    %488 = vmatpush1.msra.mxu0 0.0
    %489 = vmatprep.subr.mxu0 0.0
    %490 = vmatpush1.msra.mxu0 0.0
    %491 = vmatprep.subr.mxu0 0.0
    %492 = vmatpush1.msra.mxu0 0.0
    %493 = vmatprep.subr.mxu0 0.0
    %494 = vmatpush1.msra.mxu0 0.0
    %495 = vmatprep.subr.mxu0 0.0
    %496 = vmatpush1.msra.mxu0 0.0
    %497 = vmatprep.subr.mxu0 0.0
    %498 = vmatpush1.msra.mxu0 0.0
    %499 = vmatprep.subr.mxu0 0.0
    %500 = vmatpush1.msra.mxu0 0.0
    %501 = vmatprep.subr.mxu0 0.0
    %502 = vmatpush1.msra.mxu0 0.0
    %503 = vmatprep.subr.mxu0 0.0
    %504 = vmatpush1.msra.mxu0 0.0
    %505 = vmatprep.subr.mxu0 0.0
    %506 = vmatpush1.msra.mxu0 0.0
    %507 = vmatprep.subr.mxu0 0.0
    %508 = vmatpush1.msra.mxu0 0.0
    %509 = vmatprep.subr.mxu0 0.0
    %510 = vmatpush1.msra.mxu0 0.0
    %511 = vmatprep.subr.mxu0 0.0
    %512 = vmatpush1.msra.mxu0 0.0
    %513 = vmatprep.subr.mxu0 0.0
    %514 = vmatpush1.msra.mxu0 0.0
    %515 = vmatprep.subr.mxu0 0.0
    %516 = vmatpush1.msra.mxu0 0.0
    %517 = vmatprep.subr.mxu0 0.0
    %518 = vmatpush1.msra.mxu0 0.0
    %519 = vmatprep.subr.mxu0 0.0
    %520 = vmatpush1.msra.mxu0 0.0
    %521 = vmatprep.mubr.f32.mxu0 0.0
    %522 = vmatmul.mubr.f32.gmra.mrb[0].mxu0 %v449
    %v523 = vpop.f32.mrb[0].mxu0
    %v524 = vadd.f32 0.0, %v523
    %v525 = vpop.f32.mrb[0].mxu0
    %526 = vmatprep.mubr.f32.mxu0 0.0
    %527 = vmatmul.mubr.f32.gmra.mrb[0].mxu0 %v452
    %v528 = vpop.f32.mrb[0].mxu0
    %v529 = vadd.f32 0.0, %v528
    %v530 = vpop.f32.mrb[0].mxu0
    %531 = vdwg.mxu0
    %v532 = vadd.f32 %v425, %v524
    %v533 = vadd.f32 %v430, %v529
    %v534 = vld [vmem:[%s5] sm:$0xff]
    %v535 = vld [vmem:[#allocation10] sm:$0x1]
    %v537 = vlaneseq
    %v538 = vshrl.u32 %v537, 7
    %v539 = vsub.s32 0, %v538
    %v540 = vrot.slane %v535, %v539
    %vm542 = vcmask 64512
    %v544 = vsel %vm542, %v223, 0
    %546 = vmatprep.subr.mxu0 0.0
    %547 = vmatpush1.msra.mxu0 %v534
    %548 = vmatprep.subr.mxu0 0.0
    %549 = vmatpush1.msra.mxu0 0.0
    %550 = vmatprep.subr.mxu0 0.0
    %551 = vmatpush1.msra.mxu0 0.0
    %552 = vmatprep.subr.mxu0 0.0
    %553 = vmatpush1.msra.mxu0 0.0
    %554 = vmatprep.subr.mxu0 0.0
    %555 = vmatpush1.msra.mxu0 0.0
    %556 = vmatprep.subr.mxu0 0.0
    %557 = vmatpush1.msra.mxu0 0.0
    %558 = vmatprep.subr.mxu0 0.0
    %559 = vmatpush1.msra.mxu0 0.0
    %560 = vmatprep.subr.mxu0 0.0
    %561 = vmatpush1.msra.mxu0 0.0
    %562 = vmatprep.subr.mxu0 0.0
    %563 = vmatpush1.msra.mxu0 0.0
    %564 = vmatprep.subr.mxu0 0.0
    %565 = vmatpush1.msra.mxu0 0.0
    %566 = vmatprep.subr.mxu0 0.0
    %567 = vmatpush1.msra.mxu0 0.0
    %568 = vmatprep.subr.mxu0 0.0
    %569 = vmatpush1.msra.mxu0 0.0
    %570 = vmatprep.subr.mxu0 0.0
    %571 = vmatpush1.msra.mxu0 0.0
    %572 = vmatprep.subr.mxu0 0.0
    %573 = vmatpush1.msra.mxu0 0.0
    %574 = vmatprep.subr.mxu0 0.0
    %575 = vmatpush1.msra.mxu0 0.0
    %576 = vmatprep.subr.mxu0 0.0
    %577 = vmatpush1.msra.mxu0 0.0
    %578 = vmatprep.subr.mxu0 0.0
    %579 = vmatpush1.msra.mxu0 0.0
    %580 = vmatprep.subr.mxu0 0.0
    %581 = vmatpush1.msra.mxu0 0.0
    %582 = vmatprep.subr.mxu0 0.0
    %583 = vmatpush1.msra.mxu0 0.0
    %584 = vmatprep.subr.mxu0 0.0
    %585 = vmatpush1.msra.mxu0 0.0
    %586 = vmatprep.subr.mxu0 0.0
    %587 = vmatpush1.msra.mxu0 0.0
    %588 = vmatprep.subr.mxu0 0.0
    %589 = vmatpush1.msra.mxu0 0.0
    %590 = vmatprep.subr.mxu0 0.0
    %591 = vmatpush1.msra.mxu0 0.0
    %592 = vmatprep.subr.mxu0 0.0
    %593 = vmatpush1.msra.mxu0 0.0
    %594 = vmatprep.subr.mxu0 0.0
    %595 = vmatpush1.msra.mxu0 0.0
    %596 = vmatprep.subr.mxu0 0.0
    %597 = vmatpush1.msra.mxu0 0.0
    %598 = vmatprep.subr.mxu0 0.0
    %599 = vmatpush1.msra.mxu0 0.0
    %600 = vmatprep.subr.mxu0 0.0
    %601 = vmatpush1.msra.mxu0 0.0
    %602 = vmatprep.subr.mxu0 0.0
    %603 = vmatpush1.msra.mxu0 0.0
    %604 = vmatprep.subr.mxu0 0.0
    %605 = vmatpush1.msra.mxu0 0.0
    %606 = vmatprep.subr.mxu0 0.0
    %607 = vmatpush1.msra.mxu0 0.0
    %608 = vmatprep.subr.mxu0 0.0
    %609 = vmatpush1.msra.mxu0 0.0
    %610 = vmatprep.mubr.f32.mxu0 0.0
    %611 = vmatmul.mubr.f32.gmra.mrb[0].mxu0 %v544
    %v612 = vpop.f32.mrb[0].mxu0
    %v613 = vadd.f32 %v540, %v612
    %v614 = vpop.f32.mrb[0].mxu0
    %615 = vdwg.mxu0
    %v617 = vrot.slane %v613, 6
    %v619 = vrot.slane %v613, 4
    %v621 = vrot.slane %v613, 2
    %v623 = vsel %vm240, %v613, %v617
    %v624 = vsel %vm242, %v623, %v619
    %v625 = vsel %vm244, %v624, %v621
    %v626 = vadd.f32 %v532, %v625
    %v627 = vadd.f32 %v533, %v625
    %vm628 = vcmp.gt.f32.partialorder %v626, 0.0
    %vm629 = vcmp.gt.f32.partialorder %v627, 0.0
    %v630 = vmin.f32 %v626, 0.0
    %v631 = vmin.f32 %v627, 0.0
    %v632 = vmul.f32 %v630, 1.442695
    %v633 = vpow.pop %v632
    %v634 = vmul.f32 %v631, 1.442695
    %v635 = vpow.pop %v634
    %v636 = vsub.f32 %v633, 1.0
    %v637 = vsub.f32 %v635, 1.0
    %v638 = vsel %vm628, %v626, %v636
    %v639 = vsel %vm629, %v627, %v637
    %v641 = vrot.slane %v639, 6
    %v644 = vrot.slane %v638, 2
    %v646 = vrot.slane %v639, 4
    %v648 = vsel %vm240, %v641, %v638
    %v649 = vsel %vm242, %v648, %v644
    %v650 = vsel %vm244, %v649, %v646
    %v651 = vld [vmem:[#allocation11] sm:$0xff]
    %v652 = vld [vmem:[#allocation11 + $0x8] sm:$0xff]
    %v653 = vld [vmem:[#allocation11 + $0x10] sm:$0xff]
    %v654 = vld [vmem:[#allocation11 + $0x18] sm:$0xff]
    %v655 = vsel %vm240, %v638, %v644
    %v656 = vsel %vm242, %v655, %v646
    %v657 = vsel %vm244, %v656, %v641
    %s658 = scalar_lea.vmem [#allocation11], 32
    %v659 = vld [vmem:[%s658] sm:$0xff]
    %v660 = vld [vmem:[%s658 + $0x8] sm:$0xff]
    %v661 = vld [vmem:[%s658 + $0x10] sm:$0xff]
    %v662 = vld [vmem:[%s658 + $0x18] sm:$0xff]
    %vm663 = vcmask 261120
    %v665 = vsel %vm663, %v657, 0
    %667 = vmatprep.subr.mxu0 0.0
    %668 = vmatpush1.msra.mxu0 %v659
    %669 = vmatprep.subr.mxu0 0.0
    %670 = vmatpush1.msra.mxu0 %v660
    %671 = vmatprep.subr.mxu0 0.0
    %672 = vmatpush1.msra.mxu0 %v661
    %673 = vmatprep.subr.mxu0 0.0
    %674 = vmatpush1.msra.mxu0 %v662
    %675 = vmatprep.subr.mxu0 0.0
    %676 = vmatpush1.msra.mxu0 0.0
    %677 = vmatprep.subr.mxu0 0.0
    %678 = vmatpush1.msra.mxu0 0.0
    %679 = vmatprep.subr.mxu0 0.0
    %680 = vmatpush1.msra.mxu0 0.0
    %681 = vmatprep.subr.mxu0 0.0
    %682 = vmatpush1.msra.mxu0 0.0
    %683 = vmatprep.subr.mxu0 0.0
    %684 = vmatpush1.msra.mxu0 0.0
    %685 = vmatprep.subr.mxu0 0.0
    %686 = vmatpush1.msra.mxu0 0.0
    %687 = vmatprep.subr.mxu0 0.0
    %688 = vmatpush1.msra.mxu0 0.0
    %689 = vmatprep.subr.mxu0 0.0
    %690 = vmatpush1.msra.mxu0 0.0
    %691 = vmatprep.subr.mxu0 0.0
    %692 = vmatpush1.msra.mxu0 0.0
    %693 = vmatprep.subr.mxu0 0.0
    %694 = vmatpush1.msra.mxu0 0.0
    %695 = vmatprep.subr.mxu0 0.0
    %696 = vmatpush1.msra.mxu0 0.0
    %697 = vmatprep.subr.mxu0 0.0
    %698 = vmatpush1.msra.mxu0 0.0
    %699 = vmatprep.subr.mxu0 0.0
    %700 = vmatpush1.msra.mxu0 0.0
    %701 = vmatprep.subr.mxu0 0.0
    %702 = vmatpush1.msra.mxu0 0.0
    %703 = vmatprep.subr.mxu0 0.0
    %704 = vmatpush1.msra.mxu0 0.0
    %705 = vmatprep.subr.mxu0 0.0
    %706 = vmatpush1.msra.mxu0 0.0
    %707 = vmatprep.subr.mxu0 0.0
    %708 = vmatpush1.msra.mxu0 0.0
    %709 = vmatprep.subr.mxu0 0.0
    %710 = vmatpush1.msra.mxu0 0.0
    %711 = vmatprep.subr.mxu0 0.0
    %712 = vmatpush1.msra.mxu0 0.0
    %713 = vmatprep.subr.mxu0 0.0
    %714 = vmatpush1.msra.mxu0 0.0
    %715 = vmatprep.subr.mxu0 0.0
    %716 = vmatpush1.msra.mxu0 0.0
    %717 = vmatprep.subr.mxu0 0.0
    %718 = vmatpush1.msra.mxu0 0.0
    %719 = vmatprep.subr.mxu0 0.0
    %720 = vmatpush1.msra.mxu0 0.0
    %721 = vmatprep.subr.mxu0 0.0
    %722 = vmatpush1.msra.mxu0 0.0
    %723 = vmatprep.subr.mxu0 0.0
    %724 = vmatpush1.msra.mxu0 0.0
    %725 = vmatprep.subr.mxu0 0.0
    %726 = vmatpush1.msra.mxu0 0.0
    %727 = vmatprep.subr.mxu0 0.0
    %728 = vmatpush1.msra.mxu0 0.0
    %729 = vmatprep.subr.mxu0 0.0
    %730 = vmatpush1.msra.mxu0 0.0
    %731 = vmatprep.mubr.f32.mxu0 0.0
    %732 = vmatmul.mubr.f32.gmra.mrb[0].mxu0 %v665
    %v733 = vpop.f32.mrb[0].mxu0
    %v734 = vadd.f32 0.0, %v733
    %v735 = vpop.f32.mrb[0].mxu0
    %736 = vdwg.mxu0
    %v738 = vsel %vm663, %v650, 0
    %740 = vmatprep.subr.mxu0 0.0
    %741 = vmatpush1.msra.mxu0 %v651
    %742 = vmatprep.subr.mxu0 0.0
    %743 = vmatpush1.msra.mxu0 %v652
    %744 = vmatprep.subr.mxu0 0.0
    %745 = vmatpush1.msra.mxu0 %v653
    %746 = vmatprep.subr.mxu0 0.0
    %747 = vmatpush1.msra.mxu0 %v654
    %748 = vmatprep.subr.mxu0 0.0
    %749 = vmatpush1.msra.mxu0 0.0
    %750 = vmatprep.subr.mxu0 0.0
    %751 = vmatpush1.msra.mxu0 0.0
    %752 = vmatprep.subr.mxu0 0.0
    %753 = vmatpush1.msra.mxu0 0.0
    %754 = vmatprep.subr.mxu0 0.0
    %755 = vmatpush1.msra.mxu0 0.0
    %756 = vmatprep.subr.mxu0 0.0
    %757 = vmatpush1.msra.mxu0 0.0
    %758 = vmatprep.subr.mxu0 0.0
    %759 = vmatpush1.msra.mxu0 0.0
    %760 = vmatprep.subr.mxu0 0.0
    %761 = vmatpush1.msra.mxu0 0.0
    %762 = vmatprep.subr.mxu0 0.0
    %763 = vmatpush1.msra.mxu0 0.0
    %764 = vmatprep.subr.mxu0 0.0
    %765 = vmatpush1.msra.mxu0 0.0
    %766 = vmatprep.subr.mxu0 0.0
    %767 = vmatpush1.msra.mxu0 0.0
    %768 = vmatprep.subr.mxu0 0.0
    %769 = vmatpush1.msra.mxu0 0.0
    %770 = vmatprep.subr.mxu0 0.0
    %771 = vmatpush1.msra.mxu0 0.0
    %772 = vmatprep.subr.mxu0 0.0
    %773 = vmatpush1.msra.mxu0 0.0
    %774 = vmatprep.subr.mxu0 0.0
    %775 = vmatpush1.msra.mxu0 0.0
    %776 = vmatprep.subr.mxu0 0.0
    %777 = vmatpush1.msra.mxu0 0.0
    %778 = vmatprep.subr.mxu0 0.0
    %779 = vmatpush1.msra.mxu0 0.0
    %780 = vmatprep.subr.mxu0 0.0
    %781 = vmatpush1.msra.mxu0 0.0
    %782 = vmatprep.subr.mxu0 0.0
    %783 = vmatpush1.msra.mxu0 0.0
    %784 = vmatprep.subr.mxu0 0.0
    %785 = vmatpush1.msra.mxu0 0.0
    %786 = vmatprep.subr.mxu0 0.0
    %787 = vmatpush1.msra.mxu0 0.0
    %788 = vmatprep.subr.mxu0 0.0
    %789 = vmatpush1.msra.mxu0 0.0
    %790 = vmatprep.subr.mxu0 0.0
    %791 = vmatpush1.msra.mxu0 0.0
    %792 = vmatprep.subr.mxu0 0.0
    %793 = vmatpush1.msra.mxu0 0.0
    %794 = vmatprep.subr.mxu0 0.0
    %795 = vmatpush1.msra.mxu0 0.0
    %796 = vmatprep.subr.mxu0 0.0
    %797 = vmatpush1.msra.mxu0 0.0
    %798 = vmatprep.subr.mxu0 0.0
    %799 = vmatpush1.msra.mxu0 0.0
    %800 = vmatprep.subr.mxu0 0.0
    %801 = vmatpush1.msra.mxu0 0.0
    %802 = vmatprep.subr.mxu0 0.0
    %803 = vmatpush1.msra.mxu0 0.0
    %804 = vmatprep.mubr.f32.mxu0 0.0
    %805 = vmatmul.mubr.f32.gmra.mrb[0].mxu0 %v738
    %v806 = vpop.f32.mrb[0].mxu0
    %v807 = vadd.f32 %v734, %v806
    %v808 = vpop.f32.mrb[0].mxu0
    %809 = vdwg.mxu0
    %v810 = vrot.slane %v638, 4
    %v812 = vsel %vm240, %v644, %v810
    %v813 = vsel %vm242, %v812, %v641
    %v814 = vsel %vm244, %v813, %v639
    %s815 = scalar_lea.vmem [#allocation11], 64
    %v816 = vld [vmem:[%s815] sm:$0xff]
    %v817 = vld [vmem:[%s815 + $0x8] sm:$0xff]
    %v818 = vld [vmem:[%s815 + $0x10] sm:$0xff]
    %v819 = vld [vmem:[%s815 + $0x18] sm:$0xff]
    %v821 = vsel %vm663, %v814, 0
    %823 = vmatprep.subr.mxu0 0.0
    %824 = vmatpush1.msra.mxu0 %v816
    %825 = vmatprep.subr.mxu0 0.0
    %826 = vmatpush1.msra.mxu0 %v817
    %827 = vmatprep.subr.mxu0 0.0
    %828 = vmatpush1.msra.mxu0 %v818
    %829 = vmatprep.subr.mxu0 0.0
    %830 = vmatpush1.msra.mxu0 %v819
    %831 = vmatprep.subr.mxu0 0.0
    %832 = vmatpush1.msra.mxu0 0.0
    %833 = vmatprep.subr.mxu0 0.0
    %834 = vmatpush1.msra.mxu0 0.0
    %835 = vmatprep.subr.mxu0 0.0
    %836 = vmatpush1.msra.mxu0 0.0
    %837 = vmatprep.subr.mxu0 0.0
    %838 = vmatpush1.msra.mxu0 0.0
    %839 = vmatprep.subr.mxu0 0.0
    %840 = vmatpush1.msra.mxu0 0.0
    %841 = vmatprep.subr.mxu0 0.0
    %842 = vmatpush1.msra.mxu0 0.0
    %843 = vmatprep.subr.mxu0 0.0
    %844 = vmatpush1.msra.mxu0 0.0
    %845 = vmatprep.subr.mxu0 0.0
    %846 = vmatpush1.msra.mxu0 0.0
    %847 = vmatprep.subr.mxu0 0.0
    %848 = vmatpush1.msra.mxu0 0.0
    %849 = vmatprep.subr.mxu0 0.0
    %850 = vmatpush1.msra.mxu0 0.0
    %851 = vmatprep.subr.mxu0 0.0
    %852 = vmatpush1.msra.mxu0 0.0
    %853 = vmatprep.subr.mxu0 0.0
    %854 = vmatpush1.msra.mxu0 0.0
    %855 = vmatprep.subr.mxu0 0.0
    %856 = vmatpush1.msra.mxu0 0.0
    %857 = vmatprep.subr.mxu0 0.0
    %858 = vmatpush1.msra.mxu0 0.0
    %859 = vmatprep.subr.mxu0 0.0
    %860 = vmatpush1.msra.mxu0 0.0
    %861 = vmatprep.subr.mxu0 0.0
    %862 = vmatpush1.msra.mxu0 0.0
    %863 = vmatprep.subr.mxu0 0.0
    %864 = vmatpush1.msra.mxu0 0.0
    %865 = vmatprep.subr.mxu0 0.0
    %866 = vmatpush1.msra.mxu0 0.0
    %867 = vmatprep.subr.mxu0 0.0
    %868 = vmatpush1.msra.mxu0 0.0
    %869 = vmatprep.subr.mxu0 0.0
    %870 = vmatpush1.msra.mxu0 0.0
    %871 = vmatprep.subr.mxu0 0.0
    %872 = vmatpush1.msra.mxu0 0.0
    %873 = vmatprep.subr.mxu0 0.0
    %874 = vmatpush1.msra.mxu0 0.0
    %875 = vmatprep.subr.mxu0 0.0
    %876 = vmatpush1.msra.mxu0 0.0
    %877 = vmatprep.subr.mxu0 0.0
    %878 = vmatpush1.msra.mxu0 0.0
    %879 = vmatprep.subr.mxu0 0.0
    %880 = vmatpush1.msra.mxu0 0.0
    %881 = vmatprep.subr.mxu0 0.0
    %882 = vmatpush1.msra.mxu0 0.0
    %883 = vmatprep.subr.mxu0 0.0
    %884 = vmatpush1.msra.mxu0 0.0
    %885 = vmatprep.subr.mxu0 0.0
    %886 = vmatpush1.msra.mxu0 0.0
    %887 = vmatprep.mubr.f32.mxu0 0.0
    %888 = vmatmul.mubr.f32.gmra.mrb[0].mxu0 %v821
    %v889 = vpop.f32.mrb[0].mxu0
    %v890 = vadd.f32 0.0, %v889
    %v891 = vpop.f32.mrb[0].mxu0
    %892 = vdwg.mxu0
    %v893 = vadd.f32 %v807, %v890
    %v894 = vld [vmem:[#allocation13] sm:$0x1]
    %v896 = vlaneseq
    %v897 = vshrl.u32 %v896, 7
    %v898 = vsub.s32 0, %v897
    %v899 = vrot.slane %v894, %v898
    %v901 = vadd.f32 %v893, %v899
    %vm902 = vcmp.gt.f32.partialorder %v901, 0.0
    %v903 = vmin.f32 %v901, 0.0
    %v904 = vmul.f32 %v903, 1.442695
    %v905 = vpow.pop %v904
    %v906 = vsub.f32 %v905, 1.0
    %v907 = vsel %vm902, %v901, %v906
    %v909 = vrot.slane %v907, 6
    %v911 = vsel %vm240, %v909, %v907
    %v912 = vld [vmem:[#allocation14] sm:$0xff]
    %v913 = vld [vmem:[#allocation14 + $0x8] sm:$0xff]
    %v914 = vld [vmem:[#allocation14 + $0x10] sm:$0xff]
    %v915 = vld [vmem:[#allocation14 + $0x18] sm:$0xff]
    %v916 = vrot.slane %v907, 2
    %v918 = vsel %vm240, %v907, %v916
    %s919 = scalar_lea.vmem [#allocation14], 32
    %v920 = vld [vmem:[%s919] sm:$0xff]
    %v921 = vld [vmem:[%s919 + $0x8] sm:$0xff]
    %v922 = vld [vmem:[%s919 + $0x10] sm:$0xff]
    %v923 = vld [vmem:[%s919 + $0x18] sm:$0xff]
    %v925 = vsel %vm663, %v918, 0
    %927 = vmatprep.subr.mxu0 0.0
    %928 = vmatpush1.msra.mxu0 %v920
    %929 = vmatprep.subr.mxu0 0.0
    %930 = vmatpush1.msra.mxu0 %v921
    %931 = vmatprep.subr.mxu0 0.0
    %932 = vmatpush1.msra.mxu0 %v922
    %933 = vmatprep.subr.mxu0 0.0
    %934 = vmatpush1.msra.mxu0 %v923
    %935 = vmatprep.subr.mxu0 0.0
    %936 = vmatpush1.msra.mxu0 0.0
    %937 = vmatprep.subr.mxu0 0.0
    %938 = vmatpush1.msra.mxu0 0.0
    %939 = vmatprep.subr.mxu0 0.0
    %940 = vmatpush1.msra.mxu0 0.0
    %941 = vmatprep.subr.mxu0 0.0
    %942 = vmatpush1.msra.mxu0 0.0
    %943 = vmatprep.subr.mxu0 0.0
    %944 = vmatpush1.msra.mxu0 0.0
    %945 = vmatprep.subr.mxu0 0.0
    %946 = vmatpush1.msra.mxu0 0.0
    %947 = vmatprep.subr.mxu0 0.0
    %948 = vmatpush1.msra.mxu0 0.0
    %949 = vmatprep.subr.mxu0 0.0
    %950 = vmatpush1.msra.mxu0 0.0
    %951 = vmatprep.subr.mxu0 0.0
    %952 = vmatpush1.msra.mxu0 0.0
    %953 = vmatprep.subr.mxu0 0.0
    %954 = vmatpush1.msra.mxu0 0.0
    %955 = vmatprep.subr.mxu0 0.0
    %956 = vmatpush1.msra.mxu0 0.0
    %957 = vmatprep.subr.mxu0 0.0
    %958 = vmatpush1.msra.mxu0 0.0
    %959 = vmatprep.subr.mxu0 0.0
    %960 = vmatpush1.msra.mxu0 0.0
    %961 = vmatprep.subr.mxu0 0.0
    %962 = vmatpush1.msra.mxu0 0.0
    %963 = vmatprep.subr.mxu0 0.0
    %964 = vmatpush1.msra.mxu0 0.0
    %965 = vmatprep.subr.mxu0 0.0
    %966 = vmatpush1.msra.mxu0 0.0
    %967 = vmatprep.subr.mxu0 0.0
    %968 = vmatpush1.msra.mxu0 0.0
    %969 = vmatprep.subr.mxu0 0.0
    %970 = vmatpush1.msra.mxu0 0.0
    %971 = vmatprep.subr.mxu0 0.0
    %972 = vmatpush1.msra.mxu0 0.0
    %973 = vmatprep.subr.mxu0 0.0
    %974 = vmatpush1.msra.mxu0 0.0
    %975 = vmatprep.subr.mxu0 0.0
    %976 = vmatpush1.msra.mxu0 0.0
    %977 = vmatprep.subr.mxu0 0.0
    %978 = vmatpush1.msra.mxu0 0.0
    %979 = vmatprep.subr.mxu0 0.0
    %980 = vmatpush1.msra.mxu0 0.0
    %981 = vmatprep.subr.mxu0 0.0
    %982 = vmatpush1.msra.mxu0 0.0
    %983 = vmatprep.subr.mxu0 0.0
    %984 = vmatpush1.msra.mxu0 0.0
    %985 = vmatprep.subr.mxu0 0.0
    %986 = vmatpush1.msra.mxu0 0.0
    %987 = vmatprep.subr.mxu0 0.0
    %988 = vmatpush1.msra.mxu0 0.0
    %989 = vmatprep.subr.mxu0 0.0
    %990 = vmatpush1.msra.mxu0 0.0
    %991 = vmatprep.mubr.f32.mxu0 0.0
    %992 = vmatmul.mubr.f32.gmra.mrb[0].mxu0 %v925
    %v993 = vpop.f32.mrb[0].mxu0
    %v994 = vadd.f32 0.0, %v993
    %v995 = vpop.f32.mrb[0].mxu0
    %996 = vdwg.mxu0
    %v998 = vsel %vm663, %v911, 0
    %1000 = vmatprep.subr.mxu0 0.0
    %1001 = vmatpush1.msra.mxu0 %v912
    %1002 = vmatprep.subr.mxu0 0.0
    %1003 = vmatpush1.msra.mxu0 %v913
    %1004 = vmatprep.subr.mxu0 0.0
    %1005 = vmatpush1.msra.mxu0 %v914
    %1006 = vmatprep.subr.mxu0 0.0
    %1007 = vmatpush1.msra.mxu0 %v915
    %1008 = vmatprep.subr.mxu0 0.0
    %1009 = vmatpush1.msra.mxu0 0.0
    %1010 = vmatprep.subr.mxu0 0.0
    %1011 = vmatpush1.msra.mxu0 0.0
    %1012 = vmatprep.subr.mxu0 0.0
    %1013 = vmatpush1.msra.mxu0 0.0
    %1014 = vmatprep.subr.mxu0 0.0
    %1015 = vmatpush1.msra.mxu0 0.0
    %1016 = vmatprep.subr.mxu0 0.0
    %1017 = vmatpush1.msra.mxu0 0.0
    %1018 = vmatprep.subr.mxu0 0.0
    %1019 = vmatpush1.msra.mxu0 0.0
    %1020 = vmatprep.subr.mxu0 0.0
    %1021 = vmatpush1.msra.mxu0 0.0
    %1022 = vmatprep.subr.mxu0 0.0
    %1023 = vmatpush1.msra.mxu0 0.0
    %1024 = vmatprep.subr.mxu0 0.0
    %1025 = vmatpush1.msra.mxu0 0.0
    %1026 = vmatprep.subr.mxu0 0.0
    %1027 = vmatpush1.msra.mxu0 0.0
    %1028 = vmatprep.subr.mxu0 0.0
    %1029 = vmatpush1.msra.mxu0 0.0
    %1030 = vmatprep.subr.mxu0 0.0
    %1031 = vmatpush1.msra.mxu0 0.0
    %1032 = vmatprep.subr.mxu0 0.0
    %1033 = vmatpush1.msra.mxu0 0.0
    %1034 = vmatprep.subr.mxu0 0.0
    %1035 = vmatpush1.msra.mxu0 0.0
    %1036 = vmatprep.subr.mxu0 0.0
    %1037 = vmatpush1.msra.mxu0 0.0
    %1038 = vmatprep.subr.mxu0 0.0
    %1039 = vmatpush1.msra.mxu0 0.0
    %1040 = vmatprep.subr.mxu0 0.0
    %1041 = vmatpush1.msra.mxu0 0.0
    %1042 = vmatprep.subr.mxu0 0.0
    %1043 = vmatpush1.msra.mxu0 0.0
    %1044 = vmatprep.subr.mxu0 0.0
    %1045 = vmatpush1.msra.mxu0 0.0
    %1046 = vmatprep.subr.mxu0 0.0
    %1047 = vmatpush1.msra.mxu0 0.0
    %1048 = vmatprep.subr.mxu0 0.0
    %1049 = vmatpush1.msra.mxu0 0.0
    %1050 = vmatprep.subr.mxu0 0.0
    %1051 = vmatpush1.msra.mxu0 0.0
    %1052 = vmatprep.subr.mxu0 0.0
    %1053 = vmatpush1.msra.mxu0 0.0
    %1054 = vmatprep.subr.mxu0 0.0
    %1055 = vmatpush1.msra.mxu0 0.0
    %1056 = vmatprep.subr.mxu0 0.0
    %1057 = vmatpush1.msra.mxu0 0.0
    %1058 = vmatprep.subr.mxu0 0.0
    %1059 = vmatpush1.msra.mxu0 0.0
    %1060 = vmatprep.subr.mxu0 0.0
    %1061 = vmatpush1.msra.mxu0 0.0
    %1062 = vmatprep.subr.mxu0 0.0
    %1063 = vmatpush1.msra.mxu0 0.0
    %1064 = vmatprep.mubr.f32.mxu0 0.0
    %1065 = vmatmul.mubr.f32.gmra.mrb[0].mxu0 %v998
    %v1066 = vpop.f32.mrb[0].mxu0
    %v1067 = vadd.f32 %v994, %v1066
    %v1068 = vpop.f32.mrb[0].mxu0
    %1069 = vdwg.mxu0
    %v1070 = vrot.slane %v907, 4
    %v1072 = vsel %vm240, %v916, %v1070
    %s1073 = scalar_lea.vmem [#allocation14], 64
    %v1074 = vld [vmem:[%s1073] sm:$0xff]
    %v1075 = vld [vmem:[%s1073 + $0x8] sm:$0xff]
    %v1076 = vld [vmem:[%s1073 + $0x10] sm:$0xff]
    %v1077 = vld [vmem:[%s1073 + $0x18] sm:$0xff]
    %v1079 = vsel %vm663, %v1072, 0
    %1081 = vmatprep.subr.mxu0 0.0
    %1082 = vmatpush1.msra.mxu0 %v1074
    %1083 = vmatprep.subr.mxu0 0.0
    %1084 = vmatpush1.msra.mxu0 %v1075
    %1085 = vmatprep.subr.mxu0 0.0
    %1086 = vmatpush1.msra.mxu0 %v1076
    %1087 = vmatprep.subr.mxu0 0.0
    %1088 = vmatpush1.msra.mxu0 %v1077
    %1089 = vmatprep.subr.mxu0 0.0
    %1090 = vmatpush1.msra.mxu0 0.0
    %1091 = vmatprep.subr.mxu0 0.0
    %1092 = vmatpush1.msra.mxu0 0.0
    %1093 = vmatprep.subr.mxu0 0.0
    %1094 = vmatpush1.msra.mxu0 0.0
    %1095 = vmatprep.subr.mxu0 0.0
    %1096 = vmatpush1.msra.mxu0 0.0
    %1097 = vmatprep.subr.mxu0 0.0
    %1098 = vmatpush1.msra.mxu0 0.0
    %1099 = vmatprep.subr.mxu0 0.0
    %1100 = vmatpush1.msra.mxu0 0.0
    %1101 = vmatprep.subr.mxu0 0.0
    %1102 = vmatpush1.msra.mxu0 0.0
    %1103 = vmatprep.subr.mxu0 0.0
    %1104 = vmatpush1.msra.mxu0 0.0
    %1105 = vmatprep.subr.mxu0 0.0
    %1106 = vmatpush1.msra.mxu0 0.0
    %1107 = vmatprep.subr.mxu0 0.0
    %1108 = vmatpush1.msra.mxu0 0.0
    %1109 = vmatprep.subr.mxu0 0.0
    %1110 = vmatpush1.msra.mxu0 0.0
    %1111 = vmatprep.subr.mxu0 0.0
    %1112 = vmatpush1.msra.mxu0 0.0
    %1113 = vmatprep.subr.mxu0 0.0
    %1114 = vmatpush1.msra.mxu0 0.0
    %1115 = vmatprep.subr.mxu0 0.0
    %1116 = vmatpush1.msra.mxu0 0.0
    %1117 = vmatprep.subr.mxu0 0.0
    %1118 = vmatpush1.msra.mxu0 0.0
    %1119 = vmatprep.subr.mxu0 0.0
    %1120 = vmatpush1.msra.mxu0 0.0
    %1121 = vmatprep.subr.mxu0 0.0
    %1122 = vmatpush1.msra.mxu0 0.0
    %1123 = vmatprep.subr.mxu0 0.0
    %1124 = vmatpush1.msra.mxu0 0.0
    %1125 = vmatprep.subr.mxu0 0.0
    %1126 = vmatpush1.msra.mxu0 0.0
    %1127 = vmatprep.subr.mxu0 0.0
    %1128 = vmatpush1.msra.mxu0 0.0
    %1129 = vmatprep.subr.mxu0 0.0
    %1130 = vmatpush1.msra.mxu0 0.0
    %1131 = vmatprep.subr.mxu0 0.0
    %1132 = vmatpush1.msra.mxu0 0.0
    %1133 = vmatprep.subr.mxu0 0.0
    %1134 = vmatpush1.msra.mxu0 0.0
    %1135 = vmatprep.subr.mxu0 0.0
    %1136 = vmatpush1.msra.mxu0 0.0
    %1137 = vmatprep.subr.mxu0 0.0
    %1138 = vmatpush1.msra.mxu0 0.0
    %1139 = vmatprep.subr.mxu0 0.0
    %1140 = vmatpush1.msra.mxu0 0.0
    %1141 = vmatprep.subr.mxu0 0.0
    %1142 = vmatpush1.msra.mxu0 0.0
    %1143 = vmatprep.subr.mxu0 0.0
    %1144 = vmatpush1.msra.mxu0 0.0
    %1145 = vmatprep.mubr.f32.mxu0 0.0
    %1146 = vmatmul.mubr.f32.gmra.mrb[0].mxu0 %v1079
    %v1147 = vpop.f32.mrb[0].mxu0
    %v1148 = vadd.f32 0.0, %v1147
    %v1149 = vpop.f32.mrb[0].mxu0
    %1150 = vdwg.mxu0
    %v1151 = vadd.f32 %v1067, %v1148
    %v1152 = vld [vmem:[#allocation16] sm:$0x1]
    %v1154 = vlaneseq
    %v1155 = vshrl.u32 %v1154, 7
    %v1156 = vsub.s32 0, %v1155
    %v1157 = vrot.slane %v1152, %v1156
    %v1159 = vadd.f32 %v1151, %v1157
    %vm1160 = vcmp.gt.f32.partialorder %v1159, 0.0
    %v1161 = vmin.f32 %v1159, 0.0
    %v1162 = vmul.f32 %v1161, 1.442695
    %v1163 = vpow.pop %v1162
    %v1164 = vsub.f32 %v1163, 1.0
    %v1165 = vsel %vm1160, %v1159, %v1164
    %v1166 = vld [vmem:[%s11] sm:$0xff]
    %v1167 = vld [vmem:[%s11 + $0x8] sm:$0xff]
    %v1168 = vld [vmem:[%s11 + $0x10] sm:$0xff]
    %v1169 = vld [vmem:[%s11 + $0x18] sm:$0xff]
    %v1170 = vld [vmem:[%s11 + $0x20] sm:$0xff]
    %v1171 = vld [vmem:[%s11 + $0x28] sm:$0xff]
    %v1172 = vld [vmem:[%s11 + $0x30] sm:$0xff]
    %v1173 = vld [vmem:[%s11 + $0x38] sm:$0xff]
    %s1174 = scalar_lea.vmem %s11, 64
    %v1175 = vld [vmem:[%s1174] sm:$0xff]
    %v1176 = vld [vmem:[%s1174 + $0x8] sm:$0xff]
    %v1177 = vld [vmem:[%s1174 + $0x10] sm:$0xff]
    %v1178 = vld [vmem:[%s1174 + $0x18] sm:$0xff]
    %v1179 = vld [vmem:[%s1174 + $0x20] sm:$0xff]
    %v1180 = vld [vmem:[%s1174 + $0x28] sm:$0xff]
    %v1181 = vld [vmem:[%s1174 + $0x30] sm:$0xff]
    %v1182 = vld [vmem:[%s1174 + $0x38] sm:$0xff]
    %vm1183 = vcmask 523264
    %v1185 = vsel %vm1183, %v1165, 0
    %1187 = vmatprep.subr.mxu0 0.0
    %1188 = vmatpush1.msra.mxu0 %v1175
    %1189 = vmatprep.subr.mxu0 0.0
    %1190 = vmatpush1.msra.mxu0 %v1176
    %1191 = vmatprep.subr.mxu0 0.0
    %1192 = vmatpush1.msra.mxu0 %v1177
    %1193 = vmatprep.subr.mxu0 0.0
    %1194 = vmatpush1.msra.mxu0 %v1178
    %1195 = vmatprep.subr.mxu0 0.0
    %1196 = vmatpush1.msra.mxu0 %v1179
    %1197 = vmatprep.subr.mxu0 0.0
    %1198 = vmatpush1.msra.mxu0 %v1180
    %1199 = vmatprep.subr.mxu0 0.0
    %1200 = vmatpush1.msra.mxu0 %v1181
    %1201 = vmatprep.subr.mxu0 0.0
    %1202 = vmatpush1.msra.mxu0 %v1182
    %1203 = vmatprep.subr.mxu0 0.0
    %1204 = vmatpush1.msra.mxu0 0.0
    %1205 = vmatprep.subr.mxu0 0.0
    %1206 = vmatpush1.msra.mxu0 0.0
    %1207 = vmatprep.subr.mxu0 0.0
    %1208 = vmatpush1.msra.mxu0 0.0
    %1209 = vmatprep.subr.mxu0 0.0
    %1210 = vmatpush1.msra.mxu0 0.0
    %1211 = vmatprep.subr.mxu0 0.0
    %1212 = vmatpush1.msra.mxu0 0.0
    %1213 = vmatprep.subr.mxu0 0.0
    %1214 = vmatpush1.msra.mxu0 0.0
    %1215 = vmatprep.subr.mxu0 0.0
    %1216 = vmatpush1.msra.mxu0 0.0
    %1217 = vmatprep.subr.mxu0 0.0
    %1218 = vmatpush1.msra.mxu0 0.0
    %1219 = vmatprep.subr.mxu0 0.0
    %1220 = vmatpush1.msra.mxu0 0.0
    %1221 = vmatprep.subr.mxu0 0.0
    %1222 = vmatpush1.msra.mxu0 0.0
    %1223 = vmatprep.subr.mxu0 0.0
    %1224 = vmatpush1.msra.mxu0 0.0
    %1225 = vmatprep.subr.mxu0 0.0
    %1226 = vmatpush1.msra.mxu0 0.0
    %1227 = vmatprep.subr.mxu0 0.0
    %1228 = vmatpush1.msra.mxu0 0.0
    %1229 = vmatprep.subr.mxu0 0.0
    %1230 = vmatpush1.msra.mxu0 0.0
    %1231 = vmatprep.subr.mxu0 0.0
    %1232 = vmatpush1.msra.mxu0 0.0
    %1233 = vmatprep.subr.mxu0 0.0
    %1234 = vmatpush1.msra.mxu0 0.0
    %1235 = vmatprep.subr.mxu0 0.0
    %1236 = vmatpush1.msra.mxu0 0.0
    %1237 = vmatprep.subr.mxu0 0.0
    %1238 = vmatpush1.msra.mxu0 0.0
    %1239 = vmatprep.subr.mxu0 0.0
    %1240 = vmatpush1.msra.mxu0 0.0
    %1241 = vmatprep.subr.mxu0 0.0
    %1242 = vmatpush1.msra.mxu0 0.0
    %1243 = vmatprep.subr.mxu0 0.0
    %1244 = vmatpush1.msra.mxu0 0.0
    %1245 = vmatprep.subr.mxu0 0.0
    %1246 = vmatpush1.msra.mxu0 0.0
    %1247 = vmatprep.subr.mxu0 0.0
    %1248 = vmatpush1.msra.mxu0 0.0
    %1249 = vmatprep.subr.mxu0 0.0
    %1250 = vmatpush1.msra.mxu0 0.0
    %1251 = vmatprep.mubr.f32.mxu0 0.0
    %1252 = vmatmul.mubr.f32.gmra.mrb[0].mxu0 %v1185
    %v1253 = vpop.f32.mrb[0].mxu0
    %v1254 = vadd.f32 0.0, %v1253
    %v1255 = vpop.f32.mrb[0].mxu0
    %1256 = vdwg.mxu0
    %v1257 = vrot.slane %v1165, 2
    %v1258 = vsel %vm1183, %v1257, 0
    %1260 = vmatprep.subr.mxu0 0.0
    %1261 = vmatpush1.msra.mxu0 %v1166
    %1262 = vmatprep.subr.mxu0 0.0
    %1263 = vmatpush1.msra.mxu0 %v1167
    %1264 = vmatprep.subr.mxu0 0.0
    %1265 = vmatpush1.msra.mxu0 %v1168
    %1266 = vmatprep.subr.mxu0 0.0
    %1267 = vmatpush1.msra.mxu0 %v1169
    %1268 = vmatprep.subr.mxu0 0.0
    %1269 = vmatpush1.msra.mxu0 %v1170
    %1270 = vmatprep.subr.mxu0 0.0
    %1271 = vmatpush1.msra.mxu0 %v1171
    %1272 = vmatprep.subr.mxu0 0.0
    %1273 = vmatpush1.msra.mxu0 %v1172
    %1274 = vmatprep.subr.mxu0 0.0
    %1275 = vmatpush1.msra.mxu0 %v1173
    %1276 = vmatprep.subr.mxu0 0.0
    %1277 = vmatpush1.msra.mxu0 0.0
    %1278 = vmatprep.subr.mxu0 0.0
    %1279 = vmatpush1.msra.mxu0 0.0
    %1280 = vmatprep.subr.mxu0 0.0
    %1281 = vmatpush1.msra.mxu0 0.0
    %1282 = vmatprep.subr.mxu0 0.0
    %1283 = vmatpush1.msra.mxu0 0.0
    %1284 = vmatprep.subr.mxu0 0.0
    %1285 = vmatpush1.msra.mxu0 0.0
    %1286 = vmatprep.subr.mxu0 0.0
    %1287 = vmatpush1.msra.mxu0 0.0
    %1288 = vmatprep.subr.mxu0 0.0
    %1289 = vmatpush1.msra.mxu0 0.0
    %1290 = vmatprep.subr.mxu0 0.0
    %1291 = vmatpush1.msra.mxu0 0.0
    %1292 = vmatprep.subr.mxu0 0.0
    %1293 = vmatpush1.msra.mxu0 0.0
    %1294 = vmatprep.subr.mxu0 0.0
    %1295 = vmatpush1.msra.mxu0 0.0
    %1296 = vmatprep.subr.mxu0 0.0
    %1297 = vmatpush1.msra.mxu0 0.0
    %1298 = vmatprep.subr.mxu0 0.0
    %1299 = vmatpush1.msra.mxu0 0.0
    %1300 = vmatprep.subr.mxu0 0.0
    %1301 = vmatpush1.msra.mxu0 0.0
    %1302 = vmatprep.subr.mxu0 0.0
    %1303 = vmatpush1.msra.mxu0 0.0
    %1304 = vmatprep.subr.mxu0 0.0
    %1305 = vmatpush1.msra.mxu0 0.0
    %1306 = vmatprep.subr.mxu0 0.0
    %1307 = vmatpush1.msra.mxu0 0.0
    %1308 = vmatprep.subr.mxu0 0.0
    %1309 = vmatpush1.msra.mxu0 0.0
    %1310 = vmatprep.subr.mxu0 0.0
    %1311 = vmatpush1.msra.mxu0 0.0
    %1312 = vmatprep.subr.mxu0 0.0
    %1313 = vmatpush1.msra.mxu0 0.0
    %1314 = vmatprep.subr.mxu0 0.0
    %1315 = vmatpush1.msra.mxu0 0.0
    %1316 = vmatprep.subr.mxu0 0.0
    %1317 = vmatpush1.msra.mxu0 0.0
    %1318 = vmatprep.subr.mxu0 0.0
    %1319 = vmatpush1.msra.mxu0 0.0
    %1320 = vmatprep.subr.mxu0 0.0
    %1321 = vmatpush1.msra.mxu0 0.0
    %1322 = vmatprep.subr.mxu0 0.0
    %1323 = vmatpush1.msra.mxu0 0.0
    %1324 = vmatprep.mubr.f32.mxu0 0.0
    %1325 = vmatmul.mubr.f32.gmra.mrb[0].mxu0 %v1258
    %v1326 = vpop.f32.mrb[0].mxu0
    %v1327 = vadd.f32 %v1254, %v1326
    %v1328 = vpop.f32.mrb[0].mxu0
    %1329 = vdwg.mxu0
    %s1330 = scalar_lea.vmem %s11, 128
    %v1331 = vld [vmem:[%s1330] sm:$0xff]
    %v1332 = vld [vmem:[%s1330 + $0x8] sm:$0xff]
    %v1333 = vld [vmem:[%s1330 + $0x10] sm:$0xff]
    %v1334 = vld [vmem:[%s1330 + $0x18] sm:$0xff]
    %v1335 = vld [vmem:[%s1330 + $0x20] sm:$0xff]
    %v1336 = vld [vmem:[%s1330 + $0x28] sm:$0xff]
    %v1337 = vld [vmem:[%s1330 + $0x30] sm:$0xff]
    %v1338 = vld [vmem:[%s1330 + $0x38] sm:$0xff]
    %1339 = vmatprep.subr.mxu0 0.0
    %1340 = vmatpush1.msra.mxu0 %v1331
    %1341 = vmatprep.subr.mxu0 0.0
    %1342 = vmatpush1.msra.mxu0 %v1332
    %1343 = vmatprep.subr.mxu0 0.0
    %1344 = vmatpush1.msra.mxu0 %v1333
    %1345 = vmatprep.subr.mxu0 0.0
    %1346 = vmatpush1.msra.mxu0 %v1334
    %1347 = vmatprep.subr.mxu0 0.0
    %1348 = vmatpush1.msra.mxu0 %v1335
    %1349 = vmatprep.subr.mxu0 0.0
    %1350 = vmatpush1.msra.mxu0 %v1336
    %1351 = vmatprep.subr.mxu0 0.0
    %1352 = vmatpush1.msra.mxu0 %v1337
    %1353 = vmatprep.subr.mxu0 0.0
    %1354 = vmatpush1.msra.mxu0 %v1338
    %1355 = vmatprep.subr.mxu0 0.0
    %1356 = vmatpush1.msra.mxu0 0.0
    %1357 = vmatprep.subr.mxu0 0.0
    %1358 = vmatpush1.msra.mxu0 0.0
    %1359 = vmatprep.subr.mxu0 0.0
    %1360 = vmatpush1.msra.mxu0 0.0
    %1361 = vmatprep.subr.mxu0 0.0
    %1362 = vmatpush1.msra.mxu0 0.0
    %1363 = vmatprep.subr.mxu0 0.0
    %1364 = vmatpush1.msra.mxu0 0.0
    %1365 = vmatprep.subr.mxu0 0.0
    %1366 = vmatpush1.msra.mxu0 0.0
    %1367 = vmatprep.subr.mxu0 0.0
    %1368 = vmatpush1.msra.mxu0 0.0
    %1369 = vmatprep.subr.mxu0 0.0
    %1370 = vmatpush1.msra.mxu0 0.0
    %1371 = vmatprep.subr.mxu0 0.0
    %1372 = vmatpush1.msra.mxu0 0.0
    %1373 = vmatprep.subr.mxu0 0.0
    %1374 = vmatpush1.msra.mxu0 0.0
    %1375 = vmatprep.subr.mxu0 0.0
    %1376 = vmatpush1.msra.mxu0 0.0
    %1377 = vmatprep.subr.mxu0 0.0
    %1378 = vmatpush1.msra.mxu0 0.0
    %1379 = vmatprep.subr.mxu0 0.0
    %1380 = vmatpush1.msra.mxu0 0.0
    %1381 = vmatprep.subr.mxu0 0.0
    %1382 = vmatpush1.msra.mxu0 0.0
    %1383 = vmatprep.subr.mxu0 0.0
    %1384 = vmatpush1.msra.mxu0 0.0
    %1385 = vmatprep.subr.mxu0 0.0
    %1386 = vmatpush1.msra.mxu0 0.0
    %1387 = vmatprep.subr.mxu0 0.0
    %1388 = vmatpush1.msra.mxu0 0.0
    %1389 = vmatprep.subr.mxu0 0.0
    %1390 = vmatpush1.msra.mxu0 0.0
    %1391 = vmatprep.subr.mxu0 0.0
    %1392 = vmatpush1.msra.mxu0 0.0
    %1393 = vmatprep.subr.mxu0 0.0
    %1394 = vmatpush1.msra.mxu0 0.0
    %1395 = vmatprep.subr.mxu0 0.0
    %1396 = vmatpush1.msra.mxu0 0.0
    %1397 = vmatprep.subr.mxu0 0.0
    %1398 = vmatpush1.msra.mxu0 0.0
    %1399 = vmatprep.subr.mxu0 0.0
    %1400 = vmatpush1.msra.mxu0 0.0
    %1401 = vmatprep.subr.mxu0 0.0
    %1402 = vmatpush1.msra.mxu0 0.0
    %1403 = vmatprep.mubr.f32.mxu0 0.0
    %1404 = vmatmul.mubr.f32.gmra.mrb[0].mxu0 %v1258
    %v1405 = vpop.f32.mrb[0].mxu0
    %v1406 = vadd.f32 0.0, %v1405
    %v1407 = vpop.f32.mrb[0].mxu0
    %1408 = vdwg.mxu0
    %v1409 = vadd.f32 %v1327, %v1406
    %v1410 = vld [vmem:[#allocation17] sm:$0x1]
    %v1412 = vlaneseq
    %v1413 = vshrl.u32 %v1412, 7
    %v1414 = vsub.s32 0, %v1413
    %v1415 = vrot.slane %v1410, %v1414
    %v1417 = vadd.f32 %v1409, %v1415
    %vm1418 = vcmp.gt.f32.partialorder %v1417, 0.0
    %v1419 = vmin.f32 %v1417, 0.0
    %v1420 = vmul.f32 %v1419, 1.442695
    %v1421 = vpow.pop %v1420
    %v1422 = vsub.f32 %v1421, 1.0
    %v1423 = vsel %vm1418, %v1417, %v1422
    %v1424 = vld [vmem:[#allocation19] sm:$0xff]
    %v1425 = vld [vmem:[#allocation19 + $0x8] sm:$0xff]
    %v1426 = vld [vmem:[#allocation19 + $0x10] sm:$0xff]
    %v1427 = vld [vmem:[#allocation19 + $0x18] sm:$0xff]
    %v1428 = vld [vmem:[#allocation19 + $0x20] sm:$0xff]
    %v1429 = vld [vmem:[#allocation19 + $0x28] sm:$0xff]
    %v1430 = vld [vmem:[#allocation19 + $0x30] sm:$0xff]
    %v1431 = vld [vmem:[#allocation19 + $0x38] sm:$0xff]
    %v1432 = vld [vmem:[%s14] sm:$0xff]
    %1433 = vmatprep.subr.mxu0 0.0
    %1434 = vmatpush1.msra.mxu0 %v1432
    %1435 = vmatprep.subr.mxu0 0.0
    %1436 = vmatpush1.msra.mxu0 0.0
    %1437 = vmatprep.subr.mxu0 0.0
    %1438 = vmatpush1.msra.mxu0 0.0
    %1439 = vmatprep.subr.mxu0 0.0
    %1440 = vmatpush1.msra.mxu0 0.0
    %1441 = vmatprep.subr.mxu0 0.0
    %1442 = vmatpush1.msra.mxu0 0.0
    %1443 = vmatprep.subr.mxu0 0.0
    %1444 = vmatpush1.msra.mxu0 0.0
    %1445 = vmatprep.subr.mxu0 0.0
    %1446 = vmatpush1.msra.mxu0 0.0
    %1447 = vmatprep.subr.mxu0 0.0
    %1448 = vmatpush1.msra.mxu0 0.0
    %1449 = vmatprep.subr.mxu0 0.0
    %1450 = vmatpush1.msra.mxu0 0.0
    %1451 = vmatprep.subr.mxu0 0.0
    %1452 = vmatpush1.msra.mxu0 0.0
    %1453 = vmatprep.subr.mxu0 0.0
    %1454 = vmatpush1.msra.mxu0 0.0
    %1455 = vmatprep.subr.mxu0 0.0
    %1456 = vmatpush1.msra.mxu0 0.0
    %1457 = vmatprep.subr.mxu0 0.0
    %1458 = vmatpush1.msra.mxu0 0.0
    %1459 = vmatprep.subr.mxu0 0.0
    %1460 = vmatpush1.msra.mxu0 0.0
    %1461 = vmatprep.subr.mxu0 0.0
    %1462 = vmatpush1.msra.mxu0 0.0
    %1463 = vmatprep.subr.mxu0 0.0
    %1464 = vmatpush1.msra.mxu0 0.0
    %1465 = vmatprep.subr.mxu0 0.0
    %1466 = vmatpush1.msra.mxu0 0.0
    %1467 = vmatprep.subr.mxu0 0.0
    %1468 = vmatpush1.msra.mxu0 0.0
    %1469 = vmatprep.subr.mxu0 0.0
    %1470 = vmatpush1.msra.mxu0 0.0
    %1471 = vmatprep.subr.mxu0 0.0
    %1472 = vmatpush1.msra.mxu0 0.0
    %1473 = vmatprep.subr.mxu0 0.0
    %1474 = vmatpush1.msra.mxu0 0.0
    %1475 = vmatprep.subr.mxu0 0.0
    %1476 = vmatpush1.msra.mxu0 0.0
    %1477 = vmatprep.subr.mxu0 0.0
    %1478 = vmatpush1.msra.mxu0 0.0
    %1479 = vmatprep.subr.mxu0 0.0
    %1480 = vmatpush1.msra.mxu0 0.0
    %1481 = vmatprep.subr.mxu0 0.0
    %1482 = vmatpush1.msra.mxu0 0.0
    %1483 = vmatprep.subr.mxu0 0.0
    %1484 = vmatpush1.msra.mxu0 0.0
    %1485 = vmatprep.subr.mxu0 0.0
    %1486 = vmatpush1.msra.mxu0 0.0
    %1487 = vmatprep.subr.mxu0 0.0
    %1488 = vmatpush1.msra.mxu0 0.0
    %1489 = vmatprep.subr.mxu0 0.0
    %1490 = vmatpush1.msra.mxu0 0.0
    %1491 = vmatprep.subr.mxu0 0.0
    %1492 = vmatpush1.msra.mxu0 0.0
    %1493 = vmatprep.subr.mxu0 0.0
    %1494 = vmatpush1.msra.mxu0 0.0
    %1495 = vmatprep.subr.mxu0 0.0
    %1496 = vmatpush1.msra.mxu0 0.0
    %1497 = vmatprep.mubr.f32.mxu0 0.0
    %1498 = vmatmul.mubr.f32.gmra.mrb[0].mxu0 %v544
    %v1499 = vpop.f32.mrb[0].mxu0
    %v1500 = vadd.f32 0.0, %v1499
    %v1501 = vpop.f32.mrb[0].mxu0
    %1502 = vdwg.mxu0
    %v1504 = vsel %vm1183, %v1423, 0
    %1506 = vmatprep.subr.mxu0 0.0
    %1507 = vmatpush1.msra.mxu0 %v1424
    %1508 = vmatprep.subr.mxu0 0.0
    %1509 = vmatpush1.msra.mxu0 %v1425
    %1510 = vmatprep.subr.mxu0 0.0
    %1511 = vmatpush1.msra.mxu0 %v1426
    %1512 = vmatprep.subr.mxu0 0.0
    %1513 = vmatpush1.msra.mxu0 %v1427
    %1514 = vmatprep.subr.mxu0 0.0
    %1515 = vmatpush1.msra.mxu0 %v1428
    %1516 = vmatprep.subr.mxu0 0.0
    %1517 = vmatpush1.msra.mxu0 %v1429
    %1518 = vmatprep.subr.mxu0 0.0
    %1519 = vmatpush1.msra.mxu0 %v1430
    %1520 = vmatprep.subr.mxu0 0.0
    %1521 = vmatpush1.msra.mxu0 %v1431
    %1522 = vmatprep.subr.mxu0 0.0
    %1523 = vmatpush1.msra.mxu0 0.0
    %1524 = vmatprep.subr.mxu0 0.0
    %1525 = vmatpush1.msra.mxu0 0.0
    %1526 = vmatprep.subr.mxu0 0.0
    %1527 = vmatpush1.msra.mxu0 0.0
    %1528 = vmatprep.subr.mxu0 0.0
    %1529 = vmatpush1.msra.mxu0 0.0
    %1530 = vmatprep.subr.mxu0 0.0
    %1531 = vmatpush1.msra.mxu0 0.0
    %1532 = vmatprep.subr.mxu0 0.0
    %1533 = vmatpush1.msra.mxu0 0.0
    %1534 = vmatprep.subr.mxu0 0.0
    %1535 = vmatpush1.msra.mxu0 0.0
    %1536 = vmatprep.subr.mxu0 0.0
    %1537 = vmatpush1.msra.mxu0 0.0
    %1538 = vmatprep.subr.mxu0 0.0
    %1539 = vmatpush1.msra.mxu0 0.0
    %1540 = vmatprep.subr.mxu0 0.0
    %1541 = vmatpush1.msra.mxu0 0.0
    %1542 = vmatprep.subr.mxu0 0.0
    %1543 = vmatpush1.msra.mxu0 0.0
    %1544 = vmatprep.subr.mxu0 0.0
    %1545 = vmatpush1.msra.mxu0 0.0
    %1546 = vmatprep.subr.mxu0 0.0
    %1547 = vmatpush1.msra.mxu0 0.0
    %1548 = vmatprep.subr.mxu0 0.0
    %1549 = vmatpush1.msra.mxu0 0.0
    %1550 = vmatprep.subr.mxu0 0.0
    %1551 = vmatpush1.msra.mxu0 0.0
    %1552 = vmatprep.subr.mxu0 0.0
    %1553 = vmatpush1.msra.mxu0 0.0
    %1554 = vmatprep.subr.mxu0 0.0
    %1555 = vmatpush1.msra.mxu0 0.0
    %1556 = vmatprep.subr.mxu0 0.0
    %1557 = vmatpush1.msra.mxu0 0.0
    %1558 = vmatprep.subr.mxu0 0.0
    %1559 = vmatpush1.msra.mxu0 0.0
    %1560 = vmatprep.subr.mxu0 0.0
    %1561 = vmatpush1.msra.mxu0 0.0
    %1562 = vmatprep.subr.mxu0 0.0
    %1563 = vmatpush1.msra.mxu0 0.0
    %1564 = vmatprep.subr.mxu0 0.0
    %1565 = vmatpush1.msra.mxu0 0.0
    %1566 = vmatprep.subr.mxu0 0.0
    %1567 = vmatpush1.msra.mxu0 0.0
    %1568 = vmatprep.subr.mxu0 0.0
    %1569 = vmatpush1.msra.mxu0 0.0
    %1570 = vmatprep.mubr.f32.mxu0 0.0
    %1571 = vmatmul.mubr.f32.gmra.mrb[0].mxu0 %v1504
    %v1572 = vpop.f32.mrb[0].mxu0
    %v1573 = vadd.f32 %v1500, %v1572
    %v1574 = vpop.f32.mrb[0].mxu0
    %1575 = vdwg.mxu0
    %v1576 = vld [vmem:[%s15] sm:$0x1]
    %v1578 = vlaneseq
    %v1579 = vshrl.u32 %v1578, 7
    %v1580 = vsub.s32 0, %v1579
    %v1581 = vrot.slane %v1576, %v1580
    %v1583 = vadd.f32 %v1573, %v1581
    %vm1584 = vcmp.gt.f32.partialorder %v1583, 0.0
    %v1585 = vmin.f32 %v1583, 0.0
    %v1586 = vmul.f32 %v1585, 1.442695
    %v1587 = vpow.pop %v1586
    %v1588 = vsub.f32 %v1587, 1.0
    %v1589 = vsel %vm1584, %v1583, %v1588
    %v1590 = vld [vmem:[%s16] sm:$0xff]
    %v1591 = vld [vmem:[%s16 + $0x8] sm:$0xff]
    %v1592 = vld [vmem:[%s16 + $0x10] sm:$0xff]
    %v1593 = vld [vmem:[%s16 + $0x18] sm:$0xff]
    %v1594 = vld [vmem:[%s16 + $0x20] sm:$0xff]
    %v1595 = vld [vmem:[%s16 + $0x28] sm:$0xff]
    %v1596 = vld [vmem:[%s16 + $0x30] sm:$0xff]
    %v1597 = vld [vmem:[%s16 + $0x38] sm:$0xff]
    %v1598 = vld [vmem:[%s16 + $0x40] sm:$0xff]
    %v1599 = vld [vmem:[%s16 + $0x48] sm:$0xff]
    %v1600 = vld [vmem:[%s16 + $0x50] sm:$0xff]
    %v1601 = vld [vmem:[%s16 + $0x58] sm:$0xff]
    %v1602 = vld [vmem:[%s16 + $0x60] sm:$0xff]
    %v1603 = vld [vmem:[%s16 + $0x68] sm:$0xff]
    %v1604 = vld [vmem:[%s16 + $0x70] sm:$0xff]
    %v1605 = vld [vmem:[%s16 + $0x78] sm:$0xff]
    %v1606 = vld [vmem:[%s17] sm:$0x1]
    %v1608 = vlaneseq
    %v1609 = vshrl.u32 %v1608, 7
    %v1610 = vsub.s32 0, %v1609
    %v1611 = vrot.slane %v1606, %v1610
    %1613 = vmatprep.subr.mxu0 0.0
    %1614 = vmatpush1.msra.mxu0 %v1590
    %1615 = vmatprep.subr.mxu0 0.0
    %1616 = vmatpush1.msra.mxu0 %v1591
    %1617 = vmatprep.subr.mxu0 0.0
    %1618 = vmatpush1.msra.mxu0 %v1592
    %1619 = vmatprep.subr.mxu0 0.0
    %1620 = vmatpush1.msra.mxu0 %v1593
    %1621 = vmatprep.subr.mxu0 0.0
    %1622 = vmatpush1.msra.mxu0 %v1594
    %1623 = vmatprep.subr.mxu0 0.0
    %1624 = vmatpush1.msra.mxu0 %v1595
    %1625 = vmatprep.subr.mxu0 0.0
    %1626 = vmatpush1.msra.mxu0 %v1596
    %1627 = vmatprep.subr.mxu0 0.0
    %1628 = vmatpush1.msra.mxu0 %v1597
    %1629 = vmatprep.subr.mxu0 0.0
    %1630 = vmatpush1.msra.mxu0 %v1598
    %1631 = vmatprep.subr.mxu0 0.0
    %1632 = vmatpush1.msra.mxu0 %v1599
    %1633 = vmatprep.subr.mxu0 0.0
    %1634 = vmatpush1.msra.mxu0 %v1600
    %1635 = vmatprep.subr.mxu0 0.0
    %1636 = vmatpush1.msra.mxu0 %v1601
    %1637 = vmatprep.subr.mxu0 0.0
    %1638 = vmatpush1.msra.mxu0 %v1602
    %1639 = vmatprep.subr.mxu0 0.0
    %1640 = vmatpush1.msra.mxu0 %v1603
    %1641 = vmatprep.subr.mxu0 0.0
    %1642 = vmatpush1.msra.mxu0 %v1604
    %1643 = vmatprep.subr.mxu0 0.0
    %1644 = vmatpush1.msra.mxu0 %v1605
    %1645 = vmatprep.subr.mxu0 0.0
    %1646 = vmatpush1.msra.mxu0 0.0
    %1647 = vmatprep.subr.mxu0 0.0
    %1648 = vmatpush1.msra.mxu0 0.0
    %1649 = vmatprep.subr.mxu0 0.0
    %1650 = vmatpush1.msra.mxu0 0.0
    %1651 = vmatprep.subr.mxu0 0.0
    %1652 = vmatpush1.msra.mxu0 0.0
    %1653 = vmatprep.subr.mxu0 0.0
    %1654 = vmatpush1.msra.mxu0 0.0
    %1655 = vmatprep.subr.mxu0 0.0
    %1656 = vmatpush1.msra.mxu0 0.0
    %1657 = vmatprep.subr.mxu0 0.0
    %1658 = vmatpush1.msra.mxu0 0.0
    %1659 = vmatprep.subr.mxu0 0.0
    %1660 = vmatpush1.msra.mxu0 0.0
    %1661 = vmatprep.subr.mxu0 0.0
    %1662 = vmatpush1.msra.mxu0 0.0
    %1663 = vmatprep.subr.mxu0 0.0
    %1664 = vmatpush1.msra.mxu0 0.0
    %1665 = vmatprep.subr.mxu0 0.0
    %1666 = vmatpush1.msra.mxu0 0.0
    %1667 = vmatprep.subr.mxu0 0.0
    %1668 = vmatpush1.msra.mxu0 0.0
    %1669 = vmatprep.subr.mxu0 0.0
    %1670 = vmatpush1.msra.mxu0 0.0
    %1671 = vmatprep.subr.mxu0 0.0
    %1672 = vmatpush1.msra.mxu0 0.0
    %1673 = vmatprep.subr.mxu0 0.0
    %1674 = vmatpush1.msra.mxu0 0.0
    %1675 = vmatprep.subr.mxu0 0.0
    %1676 = vmatpush1.msra.mxu0 0.0
    %1677 = vmatprep.mubr.f32.mxu0 0.0
    %1678 = vmatmul.mubr.f32.gmra.mrb[0].mxu0 %v1589
    %v1679 = vpop.f32.mrb[0].mxu0
    %v1680 = vadd.f32 %v1611, %v1679
    %v1681 = vpop.f32.mrb[0].mxu0
    %1682 = vdwg.mxu0
    %vm1683 = vcmask 254976
    %1684 = vst.msk [vmem:[#allocation20] sm:$0x3] %vm1683, %v1680
    // Predicated region
    $region118: #{tpu_custom_call.1} parent=1 // pred_check
      _
    $region119: #{tpu_custom_call.1} parent=1 // pred_check_branch
      %1686 = sbr.rel (0) target = $region121
    $region120: #{tpu_custom_call.1} parent=1 // pred_region
      %s1688 = ssub.s32 32, 32
      %1689 = vsyncadd [#allocation4], %s1688
      %s1691 = sshll.u32 [#allocation20], 4
      %s1692 = int_to_ptr.vmem [resolvable:$true] %s1691
      %1694 = dma.vmem_to_hbm [thread:$0]  %s1692, 32, %s18, [#allocation4]
    $region121: #{tpu_custom_call.1} parent=1 // pred_fallthru
      _
    // Predicated region
    $region122: #{tpu_custom_call.1} parent=1 // pred_check
      _
    $region123: #{tpu_custom_call.1} parent=1 // pred_check_branch
      %1696 = sbr.rel (0) target = $region125
    $region124: #{tpu_custom_call.1} parent=1 // pred_region
      %1697 = dma.done [#allocation4], 32
    $region125: #{tpu_custom_call.1} parent=1 // pred_fallthru
      _
    %1698 = vsyncpa [#allocation3], 1
    %1699 = vsyncpa [#allocation6], 1
    %1700 = vsyncpa [#allocation9], 1
    %1701 = vsyncpa [#allocation12], 1
    %1702 = vsyncpa [#allocation15], 1
    %1703 = vsyncpa [#allocation18], 1
    %1704 = vsyncpa [#allocation4], 1

</llo_original>
